<compile_context>
chip_gen: v6e
topology: v6e:2x2x1
jax: 0.10.0
libtpu: 0.0.40
codegen_flags: <defaults>
</compile_context>

<pallas_src>
from functools import partial

import jax
import jax.numpy as jnp
import numpy as np
from jax.experimental import pallas as pl
from jax.experimental.pallas import tpu as pltpu


def _round_up(x, m):
    return ((x + m - 1) // m) * m


def _knn_kernel(feat_ref, trainT_ref, labels_ref, out_ref,
                run_vals_ref, run_key_ref,
                *, max_k, nb_ks, inv_T, n_valid, c_pow2, c_pad, sent_base,
                row_slab):
    n = pl.program_id(1)
    last_n = pl.num_programs(1) - 1
    tB = feat_ref.shape[0]
    tN = trainT_ref.shape[1]
    RW = run_vals_ref.shape[1]                       # running-buffer lane width (128)
    RS = row_slab
    neg_inf = jnp.float32(-jnp.inf)
    big = jnp.int32(2147483647)

    # ---- init running top-k state on the first N chunk of every B block ------
    @pl.when(n == 0)
    def _init():
        lane128 = jax.lax.broadcasted_iota(jnp.int32, (tB, RW), 1)
        run_vals_ref[...] = jnp.full((tB, RW), neg_inf, jnp.float32)
        # distinct sentinels, all larger than any real packed (index, label) key
        run_key_ref[...] = sent_base + lane128

    # ---- chunk similarity on the MXU (bf16 in, f32 accumulate) ---------------
    sim = jnp.dot(feat_ref[...], trainT_ref[...],
                  preferred_element_type=jnp.float32)            # [tB, tN] f32

    lane = jax.lax.broadcasted_iota(jnp.int32, (1, tN), 1)
    g = n * tN + lane                                            # [1, tN] global idx
    sim = jnp.where(g < n_valid, sim, neg_inf)                   # mask N padding
    key_row = g * c_pow2 + labels_ref[...]                       # packed (idx, label)
    key_slab = jnp.broadcast_to(key_row, (RS, tN))               # hoisted (slab-invariant)

    slab_lane = jax.lax.broadcasted_iota(jnp.int32, (RS, RW), 1)
    cls_iota = jax.lax.broadcasted_iota(jnp.int32, (RS, c_pad), 1)
    label_mask = jnp.int32(c_pow2 - 1)

    # ---- strip-mined streaming merge: RS rows at a time (no vreg spills) -----
    for r in range(tB // RS):
        r0 = r * RS
        cand_v = jnp.concatenate(
            [run_vals_ref[r0:r0 + RS, :], sim[r0:r0 + RS, :]], axis=1)   # [RS, RW+tN]
        cand_k = jnp.concatenate(
            [run_key_ref[r0:r0 + RS, :], key_slab], axis=1)

        new_v = jnp.full((RS, RW), neg_inf, jnp.float32)
        new_k = sent_base + slab_lane
        for j in range(max_k):
            m = jnp.max(cand_v, axis=1, keepdims=True)                       # [RS, 1]
            sel = jnp.min(jnp.where(cand_v == m, cand_k, big),
                          axis=1, keepdims=True)                             # [RS, 1]
            cand_v = jnp.where(cand_k == sel, neg_inf, cand_v)               # knock out
            new_v = jnp.where(slab_lane == j, m, new_v)
            new_k = jnp.where(slab_lane == j, sel, new_k)
        run_vals_ref[r0:r0 + RS, :] = new_v          # full-width, unmasked stores
        run_key_ref[r0:r0 + RS, :] = new_k

        # ---- epilogue (last chunk only): softmax + cumulative weighted one-hot
        @pl.when(n == last_n)
        def _finalize(new_v=new_v, new_k=new_k, r0=r0):
            z = new_v * jnp.float32(inv_T)                       # [RS, RW]
            zmax = jnp.max(z, axis=1, keepdims=True)             # sentinels are -inf
            e = jnp.exp(z - zmax)                                # sentinel lanes -> 0
            s = jnp.sum(e, axis=1, keepdims=True)
            rcp = pl.reciprocal(s, approx=True)                  # EUP slot
            rcp = rcp * (2.0 - s * rcp)                          # one Newton step
            w = e * rcp                                          # [RS, RW]
            lbl = jnp.bitwise_and(new_k, label_mask)             # [RS, RW]

            running = jnp.zeros((RS, c_pad), jnp.float32)
            slot = 0
            for j in range(max_k):
                onlane = slab_lane == j
                w_j = jnp.sum(jnp.where(onlane, w, 0.0), axis=1, keepdims=True)
                l_j = jnp.max(jnp.where(onlane, lbl, 0), axis=1, keepdims=True)
                # select-accumulate (no float one-hot materialization)
                running = jnp.where(l_j == cls_iota, running + w_j, running)
                if (j + 1) in nb_ks:
                    # lane-aligned, unmasked slab store of this nb_knn snapshot
                    out_ref[r0:r0 + RS, slot * c_pad:(slot + 1) * c_pad] = running
                    slot += 1


def knn_forward(features, train_features_T, train_labels, nb_knn, T, num_classes,
                *, tile_b=256, tile_n=512, row_slab=8):
    """features: [B, D] f32; train_features_T: [D, N] f32; train_labels: [N] int."""
    B, D = features.shape
    D2, N = train_features_T.shape
    assert D2 == D
    nb_ks = tuple(sorted({int(k) for k in nb_knn}))
    nk = len(nb_ks)
    max_k = nb_ks[-1]
    assert nb_ks[0] >= 1
    assert max_k <= 128, "running top-k buffer is 128 lanes wide (max(nb_knn) <= 128)"
    assert N >= max_k
    assert row_slab in (8, 16, 32)

    c_pow2 = int(pl.next_power_of_2(int(num_classes)))
    c_pad = _round_up(int(num_classes), 128)
    d_pad = _round_up(D, 256)                  # full 256-wide MXU K tiles (v6e/v7x)

    tile_b = max(16, _round_up(min(int(tile_b), B), 16))
    # keep >= 2 B blocks when the batch allows so both v7x TensorCores get work
    if B > 16 and _round_up(B, tile_b) // tile_b < 2:
        tile_b = max(16, _round_up((B + 1) // 2, 16))
    assert tile_b % row_slab == 0
    b_pad = _round_up(B, tile_b)

    tile_n = _round_up(min(int(tile_n), _round_up(N, 128)), 128)
    n_pad = _round_up(N, tile_n)

    sent_base = n_pad * c_pow2
    # TODO(synk): fall back to a separate label-tracking reduction when the packed
    #             (index, label) key cannot fit in int32 (huge per-rank shards).
    assert sent_base + 128 < 2 ** 31, "(index, label) packing overflows int32"

    # pad + cast (bf16 halves HBM traffic of the streamed train matrix)
    feats = jnp.zeros((b_pad, d_pad), jnp.bfloat16).at[:B, :D].set(
        features.astype(jnp.bfloat16))
    trainT = jnp.zeros((d_pad, n_pad), jnp.bfloat16).at[:D, :N].set(
        train_features_T.astype(jnp.bfloat16))
    labels = jnp.zeros((1, n_pad), jnp.int32).at[0, :N].set(
        train_labels.astype(jnp.int32).reshape(-1))

    grid_b = b_pad // tile_b
    grid_n = n_pad // tile_n

    # VMEM budget: double-buffered IO blocks + scratch + sim temporaries, capped at
    # ~3/4 of this generation's physical VMEM (48 MiB on v7x, ~96 MiB on v5e/v6e).
    est = (2 * (tile_b * d_pad * 2 + d_pad * tile_n * 2 + tile_n * 4
                + tile_b * nk * c_pad * 4)
           + tile_b * 128 * 8
           + 2 * tile_b * tile_n * 4)
    try:
        phys_vmem = int(pltpu.get_tpu_info().vmem_capacity_bytes)
    except Exception:
        phys_vmem = 64 * 1024 * 1024
    vmem_cap = (phys_vmem * 3) // 4
    vmem_limit = int(min(max(est + (8 << 20), 32 << 20), vmem_cap))

    kernel = partial(_knn_kernel, max_k=max_k, nb_ks=nb_ks, inv_T=float(1.0 / T),
                     n_valid=N, c_pow2=c_pow2, c_pad=c_pad, sent_base=sent_base,
                     row_slab=row_slab)

    out = pl.pallas_call(
        kernel,
        out_shape=jax.ShapeDtypeStruct((b_pad, nk * c_pad), jnp.float32),
        grid_spec=pltpu.PrefetchScalarGridSpec(
            num_scalar_prefetch=0,
            grid=(grid_b, grid_n),
            in_specs=[
                pl.BlockSpec((tile_b, d_pad), lambda i, n: (i, 0)),
                pl.BlockSpec((d_pad, tile_n), lambda i, n: (0, n)),
                pl.BlockSpec((1, tile_n), lambda i, n: (0, n)),
            ],
            out_specs=pl.BlockSpec((tile_b, nk * c_pad), lambda i, n: (i, 0)),
            scratch_shapes=[
                pltpu.VMEM((tile_b, 128), jnp.float32),   # running top-k values
                pltpu.VMEM((tile_b, 128), jnp.int32),     # running packed idx|label keys
            ],
        ),
        compiler_params=pltpu.CompilerParams(
            dimension_semantics=("parallel", "arbitrary"),
            vmem_limit_bytes=vmem_limit,
        ),
        cost_estimate=pl.CostEstimate(
            flops=2 * b_pad * d_pad * n_pad,
            transcendentals=b_pad * 128,
            bytes_accessed=(grid_b * (d_pad * n_pad * 2 + n_pad * 4)
                            + b_pad * d_pad * 2 + b_pad * nk * c_pad * 4),
        ),
    )(feats, trainT, labels)

    cum = out.reshape(b_pad, nk, c_pad)[:B, :, :num_classes]
    slot_of = {k: s for s, k in enumerate(nb_ks)}
    return {k: cum[:, slot_of[int(k)], :] for k in nb_knn}


def _reference(features, train_features_T, train_labels, nb_knn, T, num_classes):
    # Same bf16 cast as the kernel so similarities match.
    f = features.astype(jnp.bfloat16)
    t = train_features_T.astype(jnp.bfloat16)
    sims = jnp.dot(f, t, preferred_element_type=jnp.float32)
    max_k = max(nb_knn)
    tv, ti = jax.lax.top_k(sims, max_k)
    nl = train_labels[ti]
    w = jax.nn.softmax(tv / T, axis=1)
    mat = jax.nn.one_hot(nl, num_classes, dtype=jnp.float32) * w[:, :, None]
    return {k: jnp.sum(mat[:, :k, :], axis=1) for k in nb_knn}


if __name__ == "__main__":
    key = jax.random.PRNGKey(0)
    k1, k2, k3 = jax.random.split(key, 3)

    # Small shapes consistent with the module (deliberately not 128-aligned).
    B, D, N, C = 20, 160, 1000, 16
    nb_knn = (1, 3, 5)
    T = 0.07

    features = jax.random.normal(k1, (B, D), dtype=jnp.float32)
    train_features = jax.random.normal(k2, (N, D), dtype=jnp.float32)
    train_features_T = train_features.T                      # [D, N], as in the module
    train_labels = jax.random.randint(k3, (N,), 0, C, dtype=jnp.int32)

    out = knn_forward(features, train_features_T, train_labels, nb_knn, T, C,
                      tile_b=256, tile_n=256)                # 4 streamed N chunks, 2 B blocks
    jax.block_until_ready(out)

    ref = _reference(features, train_features_T, train_labels, nb_knn, T, C)
    for k in nb_knn:
        np.testing.assert_allclose(np.asarray(out[k]), np.asarray(ref[k]),
                                   rtol=1e-3, atol=1e-3)

    print("KERNEL_OK")
</pallas_src>

<mosaic_0001>
module attributes {stable_mosaic.version = 11 : i64} {
  func.func @_knn_kernel(%arg0: i32, %arg1: i32, %arg2: memref<16x256xbf16, #tpu.memory_space<vmem>>, %arg3: memref<256x256xbf16, #tpu.memory_space<vmem>>, %arg4: memref<1x256xi32, #tpu.memory_space<vmem>>, %arg5: memref<16x384xf32, #tpu.memory_space<vmem>>, %arg6: memref<16x128xf32, #tpu.memory_space<vmem>>, %arg7: memref<16x128xi32, #tpu.memory_space<vmem>>) attributes {dimension_semantics = [#tpu.dimension_semantics<parallel>, #tpu.dimension_semantics<arbitrary>], iteration_bounds = array<i64: 2, 4>, scalar_prefetch = 0 : i64, scratch_operands = 2 : i64, tpu.core_type = #tpu.core_type<tc>, window_params = [{transform_indices = @transform_0, window_bounds = array<i64: 16, 256>}, {transform_indices = @transform_1, window_bounds = array<i64: 256, 256>}, {transform_indices = @transform_2, window_bounds = array<i64: 1, 256>}, {transform_indices = @transform_3, window_bounds = array<i64: 16, 384>}]} {
    %c0_i32 = arith.constant 0 : i32
    %0 = arith.cmpi eq, %arg1, %c0_i32 : i32
    %1 = arith.extui %0 : i1 to i32
    %cst = arith.constant 0xFF800000 : f32
    %c0_i32_0 = arith.constant 0 : i32
    %2 = arith.cmpi ne, %1, %c0_i32_0 : i32
    scf.if %2 {
      %262 = tpu.iota {dimensions = array<i32: 1>} : vector<16x128xi32>
      %263 = vector.broadcast %cst : f32 to vector<16x128xf32>
      %c0_84 = arith.constant 0 : index
      %c0_85 = arith.constant 0 : index
      %264 = vector.load %arg6[%c0_84, %c0_85] : memref<16x128xf32, #tpu.memory_space<vmem>>, vector<16x128xf32>
      tpu.vector_store %arg6[%c0_84, %c0_85], %263 {strides = array<i32>} : memref<16x128xf32, #tpu.memory_space<vmem>>, vector<16x128xf32>,
      %c16384_i32_86 = arith.constant 16384 : i32
      %265 = vector.broadcast %c16384_i32_86 : i32 to vector<16x128xi32>
      %266 = arith.addi %265, %262 : vector<16x128xi32>
      %c0_87 = arith.constant 0 : index
      %c0_88 = arith.constant 0 : index
      %267 = vector.load %arg7[%c0_87, %c0_88] : memref<16x128xi32, #tpu.memory_space<vmem>>, vector<16x128xi32>
      tpu.vector_store %arg7[%c0_87, %c0_88], %266 {strides = array<i32>} : memref<16x128xi32, #tpu.memory_space<vmem>>, vector<16x128xi32>,
    } else {
    }
    %c0 = arith.constant 0 : index
    %c0_1 = arith.constant 0 : index
    %3 = vector.load %arg2[%c0, %c0_1] : memref<16x256xbf16, #tpu.memory_space<vmem>>, vector<16x256xbf16>
    %c0_2 = arith.constant 0 : index
    %c0_3 = arith.constant 0 : index
    %4 = vector.load %arg3[%c0_2, %c0_3] : memref<256x256xbf16, #tpu.memory_space<vmem>>, vector<256x256xbf16>
    %cst_4 = arith.constant dense<0.000000e+00> : vector<16x256xf32>
    %5 = tpu.matmul %3, %4, %cst_4 {dimension_numbers = #tpu.dot_dimension_numbers<[1], [0], [0], [1], [0, 0, 1, 1], [], []>} : vector<16x256xbf16>, vector<256x256xbf16>, vector<16x256xf32> -> vector<16x256xf32>
    %6 = tpu.iota {dimensions = array<i32: 1>} : vector<1x256xi32>
    %c256_i32 = arith.constant 256 : i32
    %7 = arith.muli %arg1, %c256_i32 : i32
    %8 = vector.broadcast %7 : i32 to vector<1x256xi32>
    %9 = arith.addi %8, %6 : vector<1x256xi32>
    %c1000_i32 = arith.constant 1000 : i32
    %10 = vector.broadcast %c1000_i32 : i32 to vector<1x256xi32>
    %11 = arith.cmpi slt, %9, %10 : vector<1x256xi32>
    %cst_5 = arith.constant 0xFF800000 : f32
    %12 = vector.shape_cast %11 : vector<1x256xi1> to vector<1x256xi1>
    %13 = vector.broadcast %12 : vector<1x256xi1> to vector<16x256xi1>
    %14 = vector.broadcast %cst_5 : f32 to vector<16x256xf32>
    %15 = arith.select %13, %5, %14 : vector<16x256xi1>, vector<16x256xf32>
    %c16_i32 = arith.constant 16 : i32
    %16 = vector.broadcast %c16_i32 : i32 to vector<1x256xi32>
    %17 = arith.muli %9, %16 : vector<1x256xi32>
    %c0_6 = arith.constant 0 : index
    %c0_7 = arith.constant 0 : index
    %18 = vector.load %arg4[%c0_6, %c0_7] : memref<1x256xi32, #tpu.memory_space<vmem>>, vector<1x256xi32>
    %19 = arith.addi %17, %18 : vector<1x256xi32>
    %20 = vector.shape_cast %19 : vector<1x256xi32> to vector<1x256xi32>
    %21 = vector.broadcast %20 : vector<1x256xi32> to vector<8x256xi32>
    %22 = tpu.iota {dimensions = array<i32: 1>} : vector<8x128xi32>
    %23 = tpu.iota {dimensions = array<i32: 1>} : vector<8x128xi32>
    %c0_8 = arith.constant 0 : index
    %c0_9 = arith.constant 0 : index
    %24 = vector.load %arg6[%c0_8, %c0_9] : memref<16x128xf32, #tpu.memory_space<vmem>>, vector<8x128xf32>
    %25 = vector.extract_strided_slice %15 {offsets = [0, 0], sizes = [8, 256], strides = [1, 1]} : vector<16x256xf32> to vector<8x256xf32>
    %26 = tpu.concatenate %24, %25 in 1 : vector<8x128xf32>, vector<8x256xf32> -> vector<8x384xf32>
    %c0_10 = arith.constant 0 : index
    %c0_11 = arith.constant 0 : index
    %27 = vector.load %arg7[%c0_10, %c0_11] : memref<16x128xi32, #tpu.memory_space<vmem>>, vector<8x128xi32>
    %28 = tpu.concatenate %27, %21 in 1 : vector<8x128xi32>, vector<8x256xi32> -> vector<8x384xi32>
    %cst_12 = arith.constant 0xFF800000 : f32
    %29 = vector.broadcast %cst_12 : f32 to vector<8x128xf32>
    %c16384_i32 = arith.constant 16384 : i32
    %30 = vector.broadcast %c16384_i32 : i32 to vector<8x128xi32>
    %31 = arith.addi %30, %22 : vector<8x128xi32>
    %cst_13 = arith.constant dense<0xFF800000> : vector<8xf32>
    %32 = vector.multi_reduction <maximumf>, %26, %cst_13 [1] : vector<8x384xf32> to vector<8xf32>
    %33 = vector.shape_cast %32 : vector<8xf32> to vector<8x1xf32>
    %34 = vector.broadcast %33 : vector<8x1xf32> to vector<8x384xf32>
    %35 = arith.cmpf oeq, %26, %34 : vector<8x384xf32>
    %c2147483647_i32 = arith.constant 2147483647 : i32
    %36 = vector.broadcast %c2147483647_i32 : i32 to vector<8x384xi32>
    %37 = arith.select %35, %28, %36 : vector<8x384xi1>, vector<8x384xi32>
    %cst_14 = arith.constant dense<2147483647> : vector<8xi32>
    %38 = vector.multi_reduction <minsi>, %37, %cst_14 [1] : vector<8x384xi32> to vector<8xi32>
    %39 = vector.shape_cast %38 : vector<8xi32> to vector<8x1xi32>
    %40 = vector.broadcast %39 : vector<8x1xi32> to vector<8x384xi32>
    %41 = arith.cmpi eq, %28, %40 : vector<8x384xi32>
    %cst_15 = arith.constant 0xFF800000 : f32
    %42 = vector.broadcast %cst_15 : f32 to vector<8x384xf32>
    %43 = arith.select %41, %42, %26 : vector<8x384xi1>, vector<8x384xf32>
    %c0_i32_16 = arith.constant 0 : i32
    %44 = vector.broadcast %c0_i32_16 : i32 to vector<8x128xi32>
    %45 = arith.cmpi eq, %22, %44 : vector<8x128xi32>
    %46 = vector.shape_cast %33 : vector<8x1xf32> to vector<8x1xf32>
    %47 = vector.broadcast %46 : vector<8x1xf32> to vector<8x128xf32>
    %48 = arith.select %45, %47, %29 : vector<8x128xi1>, vector<8x128xf32>
    %c0_i32_17 = arith.constant 0 : i32
    %49 = vector.broadcast %c0_i32_17 : i32 to vector<8x128xi32>
    %50 = arith.cmpi eq, %22, %49 : vector<8x128xi32>
    %51 = vector.shape_cast %39 : vector<8x1xi32> to vector<8x1xi32>
    %52 = vector.broadcast %51 : vector<8x1xi32> to vector<8x128xi32>
    %53 = arith.select %50, %52, %31 : vector<8x128xi1>, vector<8x128xi32>
    %cst_18 = arith.constant dense<0xFF800000> : vector<8xf32>
    %54 = vector.multi_reduction <maximumf>, %43, %cst_18 [1] : vector<8x384xf32> to vector<8xf32>
    %55 = vector.shape_cast %54 : vector<8xf32> to vector<8x1xf32>
    %56 = vector.broadcast %55 : vector<8x1xf32> to vector<8x384xf32>
    %57 = arith.cmpf oeq, %43, %56 : vector<8x384xf32>
    %c2147483647_i32_19 = arith.constant 2147483647 : i32
    %58 = vector.broadcast %c2147483647_i32_19 : i32 to vector<8x384xi32>
    %59 = arith.select %57, %28, %58 : vector<8x384xi1>, vector<8x384xi32>
    %cst_20 = arith.constant dense<2147483647> : vector<8xi32>
    %60 = vector.multi_reduction <minsi>, %59, %cst_20 [1] : vector<8x384xi32> to vector<8xi32>
    %61 = vector.shape_cast %60 : vector<8xi32> to vector<8x1xi32>
    %62 = vector.broadcast %61 : vector<8x1xi32> to vector<8x384xi32>
    %63 = arith.cmpi eq, %28, %62 : vector<8x384xi32>
    %cst_21 = arith.constant 0xFF800000 : f32
    %64 = vector.broadcast %cst_21 : f32 to vector<8x384xf32>
    %65 = arith.select %63, %64, %43 : vector<8x384xi1>, vector<8x384xf32>
    %c1_i32 = arith.constant 1 : i32
    %66 = vector.broadcast %c1_i32 : i32 to vector<8x128xi32>
    %67 = arith.cmpi eq, %22, %66 : vector<8x128xi32>
    %68 = vector.shape_cast %55 : vector<8x1xf32> to vector<8x1xf32>
    %69 = vector.broadcast %68 : vector<8x1xf32> to vector<8x128xf32>
    %70 = arith.select %67, %69, %48 : vector<8x128xi1>, vector<8x128xf32>
    %c1_i32_22 = arith.constant 1 : i32
    %71 = vector.broadcast %c1_i32_22 : i32 to vector<8x128xi32>
    %72 = arith.cmpi eq, %22, %71 : vector<8x128xi32>
    %73 = vector.shape_cast %61 : vector<8x1xi32> to vector<8x1xi32>
    %74 = vector.broadcast %73 : vector<8x1xi32> to vector<8x128xi32>
    %75 = arith.select %72, %74, %53 : vector<8x128xi1>, vector<8x128xi32>
    %cst_23 = arith.constant dense<0xFF800000> : vector<8xf32>
    %76 = vector.multi_reduction <maximumf>, %65, %cst_23 [1] : vector<8x384xf32> to vector<8xf32>
    %77 = vector.shape_cast %76 : vector<8xf32> to vector<8x1xf32>
    %78 = vector.broadcast %77 : vector<8x1xf32> to vector<8x384xf32>
    %79 = arith.cmpf oeq, %65, %78 : vector<8x384xf32>
    %c2147483647_i32_24 = arith.constant 2147483647 : i32
    %80 = vector.broadcast %c2147483647_i32_24 : i32 to vector<8x384xi32>
    %81 = arith.select %79, %28, %80 : vector<8x384xi1>, vector<8x384xi32>
    %cst_25 = arith.constant dense<2147483647> : vector<8xi32>
    %82 = vector.multi_reduction <minsi>, %81, %cst_25 [1] : vector<8x384xi32> to vector<8xi32>
    %83 = vector.shape_cast %82 : vector<8xi32> to vector<8x1xi32>
    %84 = vector.broadcast %83 : vector<8x1xi32> to vector<8x384xi32>
    %85 = arith.cmpi eq, %28, %84 : vector<8x384xi32>
    %cst_26 = arith.constant 0xFF800000 : f32
    %86 = vector.broadcast %cst_26 : f32 to vector<8x384xf32>
    %87 = arith.select %85, %86, %65 : vector<8x384xi1>, vector<8x384xf32>
    %c2_i32 = arith.constant 2 : i32
    %88 = vector.broadcast %c2_i32 : i32 to vector<8x128xi32>
    %89 = arith.cmpi eq, %22, %88 : vector<8x128xi32>
    %90 = vector.shape_cast %77 : vector<8x1xf32> to vector<8x1xf32>
    %91 = vector.broadcast %90 : vector<8x1xf32> to vector<8x128xf32>
    %92 = arith.select %89, %91, %70 : vector<8x128xi1>, vector<8x128xf32>
    %c2_i32_27 = arith.constant 2 : i32
    %93 = vector.broadcast %c2_i32_27 : i32 to vector<8x128xi32>
    %94 = arith.cmpi eq, %22, %93 : vector<8x128xi32>
    %95 = vector.shape_cast %83 : vector<8x1xi32> to vector<8x1xi32>
    %96 = vector.broadcast %95 : vector<8x1xi32> to vector<8x128xi32>
    %97 = arith.select %94, %96, %75 : vector<8x128xi1>, vector<8x128xi32>
    %cst_28 = arith.constant dense<0xFF800000> : vector<8xf32>
    %98 = vector.multi_reduction <maximumf>, %87, %cst_28 [1] : vector<8x384xf32> to vector<8xf32>
    %99 = vector.shape_cast %98 : vector<8xf32> to vector<8x1xf32>
    %100 = vector.broadcast %99 : vector<8x1xf32> to vector<8x384xf32>
    %101 = arith.cmpf oeq, %87, %100 : vector<8x384xf32>
    %c2147483647_i32_29 = arith.constant 2147483647 : i32
    %102 = vector.broadcast %c2147483647_i32_29 : i32 to vector<8x384xi32>
    %103 = arith.select %101, %28, %102 : vector<8x384xi1>, vector<8x384xi32>
    %cst_30 = arith.constant dense<2147483647> : vector<8xi32>
    %104 = vector.multi_reduction <minsi>, %103, %cst_30 [1] : vector<8x384xi32> to vector<8xi32>
    %105 = vector.shape_cast %104 : vector<8xi32> to vector<8x1xi32>
    %106 = vector.broadcast %105 : vector<8x1xi32> to vector<8x384xi32>
    %107 = arith.cmpi eq, %28, %106 : vector<8x384xi32>
    %cst_31 = arith.constant 0xFF800000 : f32
    %108 = vector.broadcast %cst_31 : f32 to vector<8x384xf32>
    %109 = arith.select %107, %108, %87 : vector<8x384xi1>, vector<8x384xf32>
    %c3_i32 = arith.constant 3 : i32
    %110 = vector.broadcast %c3_i32 : i32 to vector<8x128xi32>
    %111 = arith.cmpi eq, %22, %110 : vector<8x128xi32>
    %112 = vector.shape_cast %99 : vector<8x1xf32> to vector<8x1xf32>
    %113 = vector.broadcast %112 : vector<8x1xf32> to vector<8x128xf32>
    %114 = arith.select %111, %113, %92 : vector<8x128xi1>, vector<8x128xf32>
    %c3_i32_32 = arith.constant 3 : i32
    %115 = vector.broadcast %c3_i32_32 : i32 to vector<8x128xi32>
    %116 = arith.cmpi eq, %22, %115 : vector<8x128xi32>
    %117 = vector.shape_cast %105 : vector<8x1xi32> to vector<8x1xi32>
    %118 = vector.broadcast %117 : vector<8x1xi32> to vector<8x128xi32>
    %119 = arith.select %116, %118, %97 : vector<8x128xi1>, vector<8x128xi32>
    %cst_33 = arith.constant dense<0xFF800000> : vector<8xf32>
    %120 = vector.multi_reduction <maximumf>, %109, %cst_33 [1] : vector<8x384xf32> to vector<8xf32>
    %121 = vector.shape_cast %120 : vector<8xf32> to vector<8x1xf32>
    %122 = vector.broadcast %121 : vector<8x1xf32> to vector<8x384xf32>
    %123 = arith.cmpf oeq, %109, %122 : vector<8x384xf32>
    %c2147483647_i32_34 = arith.constant 2147483647 : i32
    %124 = vector.broadcast %c2147483647_i32_34 : i32 to vector<8x384xi32>
    %125 = arith.select %123, %28, %124 : vector<8x384xi1>, vector<8x384xi32>
    %cst_35 = arith.constant dense<2147483647> : vector<8xi32>
    %126 = vector.multi_reduction <minsi>, %125, %cst_35 [1] : vector<8x384xi32> to vector<8xi32>
    %127 = vector.shape_cast %126 : vector<8xi32> to vector<8x1xi32>
    %c4_i32 = arith.constant 4 : i32
    %128 = vector.broadcast %c4_i32 : i32 to vector<8x128xi32>
    %129 = arith.cmpi eq, %22, %128 : vector<8x128xi32>
    %130 = vector.shape_cast %121 : vector<8x1xf32> to vector<8x1xf32>
    %131 = vector.broadcast %130 : vector<8x1xf32> to vector<8x128xf32>
    %132 = arith.select %129, %131, %114 : vector<8x128xi1>, vector<8x128xf32>
    %c4_i32_36 = arith.constant 4 : i32
    %133 = vector.broadcast %c4_i32_36 : i32 to vector<8x128xi32>
    %134 = arith.cmpi eq, %22, %133 : vector<8x128xi32>
    %135 = vector.shape_cast %127 : vector<8x1xi32> to vector<8x1xi32>
    %136 = vector.broadcast %135 : vector<8x1xi32> to vector<8x128xi32>
    %137 = arith.select %134, %136, %119 : vector<8x128xi1>, vector<8x128xi32>
    %c0_37 = arith.constant 0 : index
    %c0_38 = arith.constant 0 : index
    %138 = vector.load %arg6[%c0_37, %c0_38] : memref<16x128xf32, #tpu.memory_space<vmem>>, vector<8x128xf32>
    tpu.vector_store %arg6[%c0_37, %c0_38], %132 {strides = array<i32>} : memref<16x128xf32, #tpu.memory_space<vmem>>, vector<8x128xf32>,
    %c0_39 = arith.constant 0 : index
    %c0_40 = arith.constant 0 : index
    %139 = vector.load %arg7[%c0_39, %c0_40] : memref<16x128xi32, #tpu.memory_space<vmem>>, vector<8x128xi32>
    tpu.vector_store %arg7[%c0_39, %c0_40], %137 {strides = array<i32>} : memref<16x128xi32, #tpu.memory_space<vmem>>, vector<8x128xi32>,
    %c3_i32_41 = arith.constant 3 : i32
    %140 = arith.cmpi eq, %arg1, %c3_i32_41 : i32
    %141 = arith.extui %140 : i1 to i32
    %c15_i32 = arith.constant 15 : i32
    %c0_i32_42 = arith.constant 0 : i32
    %142 = arith.cmpi ne, %141, %c0_i32_42 : i32
    scf.if %142 {
      %cst_84 = arith.constant 14.2857141 : f32
      %262 = vector.broadcast %cst_84 : f32 to vector<8x128xf32>
      %263 = arith.mulf %132, %262 : vector<8x128xf32>
      %cst_85 = arith.constant dense<0xFF800000> : vector<8xf32>
      %264 = vector.multi_reduction <maximumf>, %263, %cst_85 [1] : vector<8x128xf32> to vector<8xf32>
      %265 = vector.shape_cast %264 : vector<8xf32> to vector<8x1xf32>
      %266 = vector.broadcast %265 : vector<8x1xf32> to vector<8x128xf32>
      %267 = arith.subf %263, %266 : vector<8x128xf32>
      %268 = math.exp %267 : vector<8x128xf32>
      %cst_86 = arith.constant dense<0.000000e+00> : vector<8xf32>
      %269 = vector.multi_reduction <add>, %268, %cst_86 [1] : vector<8x128xf32> to vector<8xf32>
      %270 = vector.shape_cast %269 : vector<8xf32> to vector<8x1xf32>
      %271 = tpu.reciprocal %270 {approx = true} : vector<8x1xf32> -> vector<8x1xf32>
      %272 = arith.mulf %270, %271 : vector<8x1xf32>
      %cst_87 = arith.constant 2.000000e+00 : f32
      %273 = vector.broadcast %cst_87 : f32 to vector<8x1xf32>
      %274 = arith.subf %273, %272 : vector<8x1xf32>
      %275 = arith.mulf %271, %274 : vector<8x1xf32>
      %276 = vector.broadcast %275 : vector<8x1xf32> to vector<8x128xf32>
      %277 = arith.mulf %268, %276 : vector<8x128xf32>
      %278 = vector.broadcast %c15_i32 : i32 to vector<8x128xi32>
      %279 = arith.andi %137, %278 : vector<8x128xi32>
      %cst_88 = arith.constant 0.000000e+00 : f32
      %280 = vector.broadcast %cst_88 : f32 to vector<8x128xf32>
      %c0_i32_89 = arith.constant 0 : i32
      %281 = vector.broadcast %c0_i32_89 : i32 to vector<8x128xi32>
      %282 = arith.cmpi eq, %22, %281 : vector<8x128xi32>
      %cst_90 = arith.constant 0.000000e+00 : f32
      %283 = vector.broadcast %cst_90 : f32 to vector<8x128xf32>
      %284 = arith.select %282, %277, %283 : vector<8x128xi1>, vector<8x128xf32>
      %cst_91 = arith.constant dense<0.000000e+00> : vector<8xf32>
      %285 = vector.multi_reduction <add>, %284, %cst_91 [1] : vector<8x128xf32> to vector<8xf32>
      %286 = vector.shape_cast %285 : vector<8xf32> to vector<8x1xf32>
      %c0_i32_92 = arith.constant 0 : i32
      %287 = vector.broadcast %c0_i32_92 : i32 to vector<8x128xi32>
      %288 = arith.select %282, %279, %287 : vector<8x128xi1>, vector<8x128xi32>
      %cst_93 = arith.constant dense<-2147483648> : vector<8xi32>
      %289 = vector.multi_reduction <maxsi>, %288, %cst_93 [1] : vector<8x128xi32> to vector<8xi32>
      %290 = vector.shape_cast %289 : vector<8xi32> to vector<8x1xi32>
      %291 = vector.broadcast %290 : vector<8x1xi32> to vector<8x128xi32>
      %292 = arith.cmpi eq, %291, %23 : vector<8x128xi32>
      %293 = vector.broadcast %286 : vector<8x1xf32> to vector<8x128xf32>
      %294 = arith.addf %280, %293 : vector<8x128xf32>
      %295 = arith.select %292, %294, %280 : vector<8x128xi1>, vector<8x128xf32>
      %c0_94 = arith.constant 0 : index
      %c0_95 = arith.constant 0 : index
      %296 = vector.load %arg5[%c0_94, %c0_95] : memref<16x384xf32, #tpu.memory_space<vmem>>, vector<8x128xf32>
      tpu.vector_store %arg5[%c0_94, %c0_95], %295 {strides = array<i32>} : memref<16x384xf32, #tpu.memory_space<vmem>>, vector<8x128xf32>,
      %c1_i32_96 = arith.constant 1 : i32
      %297 = vector.broadcast %c1_i32_96 : i32 to vector<8x128xi32>
      %298 = arith.cmpi eq, %22, %297 : vector<8x128xi32>
      %cst_97 = arith.constant 0.000000e+00 : f32
      %299 = vector.broadcast %cst_97 : f32 to vector<8x128xf32>
      %300 = arith.select %298, %277, %299 : vector<8x128xi1>, vector<8x128xf32>
      %cst_98 = arith.constant dense<0.000000e+00> : vector<8xf32>
      %301 = vector.multi_reduction <add>, %300, %cst_98 [1] : vector<8x128xf32> to vector<8xf32>
      %302 = vector.shape_cast %301 : vector<8xf32> to vector<8x1xf32>
      %c0_i32_99 = arith.constant 0 : i32
      %303 = vector.broadcast %c0_i32_99 : i32 to vector<8x128xi32>
      %304 = arith.select %298, %279, %303 : vector<8x128xi1>, vector<8x128xi32>
      %cst_100 = arith.constant dense<-2147483648> : vector<8xi32>
      %305 = vector.multi_reduction <maxsi>, %304, %cst_100 [1] : vector<8x128xi32> to vector<8xi32>
      %306 = vector.shape_cast %305 : vector<8xi32> to vector<8x1xi32>
      %307 = vector.broadcast %306 : vector<8x1xi32> to vector<8x128xi32>
      %308 = arith.cmpi eq, %307, %23 : vector<8x128xi32>
      %309 = vector.broadcast %302 : vector<8x1xf32> to vector<8x128xf32>
      %310 = arith.addf %295, %309 : vector<8x128xf32>
      %311 = arith.select %308, %310, %295 : vector<8x128xi1>, vector<8x128xf32>
      %c2_i32_101 = arith.constant 2 : i32
      %312 = vector.broadcast %c2_i32_101 : i32 to vector<8x128xi32>
      %313 = arith.cmpi eq, %22, %312 : vector<8x128xi32>
      %cst_102 = arith.constant 0.000000e+00 : f32
      %314 = vector.broadcast %cst_102 : f32 to vector<8x128xf32>
      %315 = arith.select %313, %277, %314 : vector<8x128xi1>, vector<8x128xf32>
      %cst_103 = arith.constant dense<0.000000e+00> : vector<8xf32>
      %316 = vector.multi_reduction <add>, %315, %cst_103 [1] : vector<8x128xf32> to vector<8xf32>
      %317 = vector.shape_cast %316 : vector<8xf32> to vector<8x1xf32>
      %c0_i32_104 = arith.constant 0 : i32
      %318 = vector.broadcast %c0_i32_104 : i32 to vector<8x128xi32>
      %319 = arith.select %313, %279, %318 : vector<8x128xi1>, vector<8x128xi32>
      %cst_105 = arith.constant dense<-2147483648> : vector<8xi32>
      %320 = vector.multi_reduction <maxsi>, %319, %cst_105 [1] : vector<8x128xi32> to vector<8xi32>
      %321 = vector.shape_cast %320 : vector<8xi32> to vector<8x1xi32>
      %322 = vector.broadcast %321 : vector<8x1xi32> to vector<8x128xi32>
      %323 = arith.cmpi eq, %322, %23 : vector<8x128xi32>
      %324 = vector.broadcast %317 : vector<8x1xf32> to vector<8x128xf32>
      %325 = arith.addf %311, %324 : vector<8x128xf32>
      %326 = arith.select %323, %325, %311 : vector<8x128xi1>, vector<8x128xf32>
      %c0_106 = arith.constant 0 : index
      %c128 = arith.constant 128 : index
      %327 = vector.load %arg5[%c0_106, %c128] : memref<16x384xf32, #tpu.memory_space<vmem>>, vector<8x128xf32>
      tpu.vector_store %arg5[%c0_106, %c128], %326 {strides = array<i32>} : memref<16x384xf32, #tpu.memory_space<vmem>>, vector<8x128xf32>,
      %c3_i32_107 = arith.constant 3 : i32
      %328 = vector.broadcast %c3_i32_107 : i32 to vector<8x128xi32>
      %329 = arith.cmpi eq, %22, %328 : vector<8x128xi32>
      %cst_108 = arith.constant 0.000000e+00 : f32
      %330 = vector.broadcast %cst_108 : f32 to vector<8x128xf32>
      %331 = arith.select %329, %277, %330 : vector<8x128xi1>, vector<8x128xf32>
      %cst_109 = arith.constant dense<0.000000e+00> : vector<8xf32>
      %332 = vector.multi_reduction <add>, %331, %cst_109 [1] : vector<8x128xf32> to vector<8xf32>
      %333 = vector.shape_cast %332 : vector<8xf32> to vector<8x1xf32>
      %c0_i32_110 = arith.constant 0 : i32
      %334 = vector.broadcast %c0_i32_110 : i32 to vector<8x128xi32>
      %335 = arith.select %329, %279, %334 : vector<8x128xi1>, vector<8x128xi32>
      %cst_111 = arith.constant dense<-2147483648> : vector<8xi32>
      %336 = vector.multi_reduction <maxsi>, %335, %cst_111 [1] : vector<8x128xi32> to vector<8xi32>
      %337 = vector.shape_cast %336 : vector<8xi32> to vector<8x1xi32>
      %338 = vector.broadcast %337 : vector<8x1xi32> to vector<8x128xi32>
      %339 = arith.cmpi eq, %338, %23 : vector<8x128xi32>
      %340 = vector.broadcast %333 : vector<8x1xf32> to vector<8x128xf32>
      %341 = arith.addf %326, %340 : vector<8x128xf32>
      %342 = arith.select %339, %341, %326 : vector<8x128xi1>, vector<8x128xf32>
      %c4_i32_112 = arith.constant 4 : i32
      %343 = vector.broadcast %c4_i32_112 : i32 to vector<8x128xi32>
      %344 = arith.cmpi eq, %22, %343 : vector<8x128xi32>
      %cst_113 = arith.constant 0.000000e+00 : f32
      %345 = vector.broadcast %cst_113 : f32 to vector<8x128xf32>
      %346 = arith.select %344, %277, %345 : vector<8x128xi1>, vector<8x128xf32>
      %cst_114 = arith.constant dense<0.000000e+00> : vector<8xf32>
      %347 = vector.multi_reduction <add>, %346, %cst_114 [1] : vector<8x128xf32> to vector<8xf32>
      %348 = vector.shape_cast %347 : vector<8xf32> to vector<8x1xf32>
      %c0_i32_115 = arith.constant 0 : i32
      %349 = vector.broadcast %c0_i32_115 : i32 to vector<8x128xi32>
      %350 = arith.select %344, %279, %349 : vector<8x128xi1>, vector<8x128xi32>
      %cst_116 = arith.constant dense<-2147483648> : vector<8xi32>
      %351 = vector.multi_reduction <maxsi>, %350, %cst_116 [1] : vector<8x128xi32> to vector<8xi32>
      %352 = vector.shape_cast %351 : vector<8xi32> to vector<8x1xi32>
      %353 = vector.broadcast %352 : vector<8x1xi32> to vector<8x128xi32>
      %354 = arith.cmpi eq, %353, %23 : vector<8x128xi32>
      %355 = vector.broadcast %348 : vector<8x1xf32> to vector<8x128xf32>
      %356 = arith.addf %342, %355 : vector<8x128xf32>
      %357 = arith.select %354, %356, %342 : vector<8x128xi1>, vector<8x128xf32>
      %c0_117 = arith.constant 0 : index
      %c256 = arith.constant 256 : index
      %358 = vector.load %arg5[%c0_117, %c256] : memref<16x384xf32, #tpu.memory_space<vmem>>, vector<8x128xf32>
      tpu.vector_store %arg5[%c0_117, %c256], %357 {strides = array<i32>} : memref<16x384xf32, #tpu.memory_space<vmem>>, vector<8x128xf32>,
    } else {
    }
    %c8 = arith.constant 8 : index
    %c0_43 = arith.constant 0 : index
    %143 = vector.load %arg6[%c8, %c0_43] : memref<16x128xf32, #tpu.memory_space<vmem>>, vector<8x128xf32>
    %144 = vector.extract_strided_slice %15 {offsets = [8, 0], sizes = [8, 256], strides = [1, 1]} : vector<16x256xf32> to vector<8x256xf32>
    %145 = tpu.concatenate %143, %144 in 1 : vector<8x128xf32>, vector<8x256xf32> -> vector<8x384xf32>
    %c8_44 = arith.constant 8 : index
    %c0_45 = arith.constant 0 : index
    %146 = vector.load %arg7[%c8_44, %c0_45] : memref<16x128xi32, #tpu.memory_space<vmem>>, vector<8x128xi32>
    %147 = tpu.concatenate %146, %21 in 1 : vector<8x128xi32>, vector<8x256xi32> -> vector<8x384xi32>
    %cst_46 = arith.constant 0xFF800000 : f32
    %148 = vector.broadcast %cst_46 : f32 to vector<8x128xf32>
    %c16384_i32_47 = arith.constant 16384 : i32
    %149 = vector.broadcast %c16384_i32_47 : i32 to vector<8x128xi32>
    %150 = arith.addi %149, %22 : vector<8x128xi32>
    %cst_48 = arith.constant dense<0xFF800000> : vector<8xf32>
    %151 = vector.multi_reduction <maximumf>, %145, %cst_48 [1] : vector<8x384xf32> to vector<8xf32>
    %152 = vector.shape_cast %151 : vector<8xf32> to vector<8x1xf32>
    %153 = vector.broadcast %152 : vector<8x1xf32> to vector<8x384xf32>
    %154 = arith.cmpf oeq, %145, %153 : vector<8x384xf32>
    %c2147483647_i32_49 = arith.constant 2147483647 : i32
    %155 = vector.broadcast %c2147483647_i32_49 : i32 to vector<8x384xi32>
    %156 = arith.select %154, %147, %155 : vector<8x384xi1>, vector<8x384xi32>
    %cst_50 = arith.constant dense<2147483647> : vector<8xi32>
    %157 = vector.multi_reduction <minsi>, %156, %cst_50 [1] : vector<8x384xi32> to vector<8xi32>
    %158 = vector.shape_cast %157 : vector<8xi32> to vector<8x1xi32>
    %159 = vector.broadcast %158 : vector<8x1xi32> to vector<8x384xi32>
    %160 = arith.cmpi eq, %147, %159 : vector<8x384xi32>
    %cst_51 = arith.constant 0xFF800000 : f32
    %161 = vector.broadcast %cst_51 : f32 to vector<8x384xf32>
    %162 = arith.select %160, %161, %145 : vector<8x384xi1>, vector<8x384xf32>
    %c0_i32_52 = arith.constant 0 : i32
    %163 = vector.broadcast %c0_i32_52 : i32 to vector<8x128xi32>
    %164 = arith.cmpi eq, %22, %163 : vector<8x128xi32>
    %165 = vector.shape_cast %152 : vector<8x1xf32> to vector<8x1xf32>
    %166 = vector.broadcast %165 : vector<8x1xf32> to vector<8x128xf32>
    %167 = arith.select %164, %166, %148 : vector<8x128xi1>, vector<8x128xf32>
    %c0_i32_53 = arith.constant 0 : i32
    %168 = vector.broadcast %c0_i32_53 : i32 to vector<8x128xi32>
    %169 = arith.cmpi eq, %22, %168 : vector<8x128xi32>
    %170 = vector.shape_cast %158 : vector<8x1xi32> to vector<8x1xi32>
    %171 = vector.broadcast %170 : vector<8x1xi32> to vector<8x128xi32>
    %172 = arith.select %169, %171, %150 : vector<8x128xi1>, vector<8x128xi32>
    %cst_54 = arith.constant dense<0xFF800000> : vector<8xf32>
    %173 = vector.multi_reduction <maximumf>, %162, %cst_54 [1] : vector<8x384xf32> to vector<8xf32>
    %174 = vector.shape_cast %173 : vector<8xf32> to vector<8x1xf32>
    %175 = vector.broadcast %174 : vector<8x1xf32> to vector<8x384xf32>
    %176 = arith.cmpf oeq, %162, %175 : vector<8x384xf32>
    %c2147483647_i32_55 = arith.constant 2147483647 : i32
    %177 = vector.broadcast %c2147483647_i32_55 : i32 to vector<8x384xi32>
    %178 = arith.select %176, %147, %177 : vector<8x384xi1>, vector<8x384xi32>
    %cst_56 = arith.constant dense<2147483647> : vector<8xi32>
    %179 = vector.multi_reduction <minsi>, %178, %cst_56 [1] : vector<8x384xi32> to vector<8xi32>
    %180 = vector.shape_cast %179 : vector<8xi32> to vector<8x1xi32>
    %181 = vector.broadcast %180 : vector<8x1xi32> to vector<8x384xi32>
    %182 = arith.cmpi eq, %147, %181 : vector<8x384xi32>
    %cst_57 = arith.constant 0xFF800000 : f32
    %183 = vector.broadcast %cst_57 : f32 to vector<8x384xf32>
    %184 = arith.select %182, %183, %162 : vector<8x384xi1>, vector<8x384xf32>
    %c1_i32_58 = arith.constant 1 : i32
    %185 = vector.broadcast %c1_i32_58 : i32 to vector<8x128xi32>
    %186 = arith.cmpi eq, %22, %185 : vector<8x128xi32>
    %187 = vector.shape_cast %174 : vector<8x1xf32> to vector<8x1xf32>
    %188 = vector.broadcast %187 : vector<8x1xf32> to vector<8x128xf32>
    %189 = arith.select %186, %188, %167 : vector<8x128xi1>, vector<8x128xf32>
    %c1_i32_59 = arith.constant 1 : i32
    %190 = vector.broadcast %c1_i32_59 : i32 to vector<8x128xi32>
    %191 = arith.cmpi eq, %22, %190 : vector<8x128xi32>
    %192 = vector.shape_cast %180 : vector<8x1xi32> to vector<8x1xi32>
    %193 = vector.broadcast %192 : vector<8x1xi32> to vector<8x128xi32>
    %194 = arith.select %191, %193, %172 : vector<8x128xi1>, vector<8x128xi32>
    %cst_60 = arith.constant dense<0xFF800000> : vector<8xf32>
    %195 = vector.multi_reduction <maximumf>, %184, %cst_60 [1] : vector<8x384xf32> to vector<8xf32>
    %196 = vector.shape_cast %195 : vector<8xf32> to vector<8x1xf32>
    %197 = vector.broadcast %196 : vector<8x1xf32> to vector<8x384xf32>
    %198 = arith.cmpf oeq, %184, %197 : vector<8x384xf32>
    %c2147483647_i32_61 = arith.constant 2147483647 : i32
    %199 = vector.broadcast %c2147483647_i32_61 : i32 to vector<8x384xi32>
    %200 = arith.select %198, %147, %199 : vector<8x384xi1>, vector<8x384xi32>
    %cst_62 = arith.constant dense<2147483647> : vector<8xi32>
    %201 = vector.multi_reduction <minsi>, %200, %cst_62 [1] : vector<8x384xi32> to vector<8xi32>
    %202 = vector.shape_cast %201 : vector<8xi32> to vector<8x1xi32>
    %203 = vector.broadcast %202 : vector<8x1xi32> to vector<8x384xi32>
    %204 = arith.cmpi eq, %147, %203 : vector<8x384xi32>
    %cst_63 = arith.constant 0xFF800000 : f32
    %205 = vector.broadcast %cst_63 : f32 to vector<8x384xf32>
    %206 = arith.select %204, %205, %184 : vector<8x384xi1>, vector<8x384xf32>
    %c2_i32_64 = arith.constant 2 : i32
    %207 = vector.broadcast %c2_i32_64 : i32 to vector<8x128xi32>
    %208 = arith.cmpi eq, %22, %207 : vector<8x128xi32>
    %209 = vector.shape_cast %196 : vector<8x1xf32> to vector<8x1xf32>
    %210 = vector.broadcast %209 : vector<8x1xf32> to vector<8x128xf32>
    %211 = arith.select %208, %210, %189 : vector<8x128xi1>, vector<8x128xf32>
    %c2_i32_65 = arith.constant 2 : i32
    %212 = vector.broadcast %c2_i32_65 : i32 to vector<8x128xi32>
    %213 = arith.cmpi eq, %22, %212 : vector<8x128xi32>
    %214 = vector.shape_cast %202 : vector<8x1xi32> to vector<8x1xi32>
    %215 = vector.broadcast %214 : vector<8x1xi32> to vector<8x128xi32>
    %216 = arith.select %213, %215, %194 : vector<8x128xi1>, vector<8x128xi32>
    %cst_66 = arith.constant dense<0xFF800000> : vector<8xf32>
    %217 = vector.multi_reduction <maximumf>, %206, %cst_66 [1] : vector<8x384xf32> to vector<8xf32>
    %218 = vector.shape_cast %217 : vector<8xf32> to vector<8x1xf32>
    %219 = vector.broadcast %218 : vector<8x1xf32> to vector<8x384xf32>
    %220 = arith.cmpf oeq, %206, %219 : vector<8x384xf32>
    %c2147483647_i32_67 = arith.constant 2147483647 : i32
    %221 = vector.broadcast %c2147483647_i32_67 : i32 to vector<8x384xi32>
    %222 = arith.select %220, %147, %221 : vector<8x384xi1>, vector<8x384xi32>
    %cst_68 = arith.constant dense<2147483647> : vector<8xi32>
    %223 = vector.multi_reduction <minsi>, %222, %cst_68 [1] : vector<8x384xi32> to vector<8xi32>
    %224 = vector.shape_cast %223 : vector<8xi32> to vector<8x1xi32>
    %225 = vector.broadcast %224 : vector<8x1xi32> to vector<8x384xi32>
    %226 = arith.cmpi eq, %147, %225 : vector<8x384xi32>
    %cst_69 = arith.constant 0xFF800000 : f32
    %227 = vector.broadcast %cst_69 : f32 to vector<8x384xf32>
    %228 = arith.select %226, %227, %206 : vector<8x384xi1>, vector<8x384xf32>
    %c3_i32_70 = arith.constant 3 : i32
    %229 = vector.broadcast %c3_i32_70 : i32 to vector<8x128xi32>
    %230 = arith.cmpi eq, %22, %229 : vector<8x128xi32>
    %231 = vector.shape_cast %218 : vector<8x1xf32> to vector<8x1xf32>
    %232 = vector.broadcast %231 : vector<8x1xf32> to vector<8x128xf32>
    %233 = arith.select %230, %232, %211 : vector<8x128xi1>, vector<8x128xf32>
    %c3_i32_71 = arith.constant 3 : i32
    %234 = vector.broadcast %c3_i32_71 : i32 to vector<8x128xi32>
    %235 = arith.cmpi eq, %22, %234 : vector<8x128xi32>
    %236 = vector.shape_cast %224 : vector<8x1xi32> to vector<8x1xi32>
    %237 = vector.broadcast %236 : vector<8x1xi32> to vector<8x128xi32>
    %238 = arith.select %235, %237, %216 : vector<8x128xi1>, vector<8x128xi32>
    %cst_72 = arith.constant dense<0xFF800000> : vector<8xf32>
    %239 = vector.multi_reduction <maximumf>, %228, %cst_72 [1] : vector<8x384xf32> to vector<8xf32>
    %240 = vector.shape_cast %239 : vector<8xf32> to vector<8x1xf32>
    %241 = vector.broadcast %240 : vector<8x1xf32> to vector<8x384xf32>
    %242 = arith.cmpf oeq, %228, %241 : vector<8x384xf32>
    %c2147483647_i32_73 = arith.constant 2147483647 : i32
    %243 = vector.broadcast %c2147483647_i32_73 : i32 to vector<8x384xi32>
    %244 = arith.select %242, %147, %243 : vector<8x384xi1>, vector<8x384xi32>
    %cst_74 = arith.constant dense<2147483647> : vector<8xi32>
    %245 = vector.multi_reduction <minsi>, %244, %cst_74 [1] : vector<8x384xi32> to vector<8xi32>
    %246 = vector.shape_cast %245 : vector<8xi32> to vector<8x1xi32>
    %c4_i32_75 = arith.constant 4 : i32
    %247 = vector.broadcast %c4_i32_75 : i32 to vector<8x128xi32>
    %248 = arith.cmpi eq, %22, %247 : vector<8x128xi32>
    %249 = vector.shape_cast %240 : vector<8x1xf32> to vector<8x1xf32>
    %250 = vector.broadcast %249 : vector<8x1xf32> to vector<8x128xf32>
    %251 = arith.select %248, %250, %233 : vector<8x128xi1>, vector<8x128xf32>
    %c4_i32_76 = arith.constant 4 : i32
    %252 = vector.broadcast %c4_i32_76 : i32 to vector<8x128xi32>
    %253 = arith.cmpi eq, %22, %252 : vector<8x128xi32>
    %254 = vector.shape_cast %246 : vector<8x1xi32> to vector<8x1xi32>
    %255 = vector.broadcast %254 : vector<8x1xi32> to vector<8x128xi32>
    %256 = arith.select %253, %255, %238 : vector<8x128xi1>, vector<8x128xi32>
    %c8_77 = arith.constant 8 : index
    %c0_78 = arith.constant 0 : index
    %257 = vector.load %arg6[%c8_77, %c0_78] : memref<16x128xf32, #tpu.memory_space<vmem>>, vector<8x128xf32>
    tpu.vector_store %arg6[%c8_77, %c0_78], %251 {strides = array<i32>} : memref<16x128xf32, #tpu.memory_space<vmem>>, vector<8x128xf32>,
    %c8_79 = arith.constant 8 : index
    %c0_80 = arith.constant 0 : index
    %258 = vector.load %arg7[%c8_79, %c0_80] : memref<16x128xi32, #tpu.memory_space<vmem>>, vector<8x128xi32>
    tpu.vector_store %arg7[%c8_79, %c0_80], %256 {strides = array<i32>} : memref<16x128xi32, #tpu.memory_space<vmem>>, vector<8x128xi32>,
    %c3_i32_81 = arith.constant 3 : i32
    %259 = arith.cmpi eq, %arg1, %c3_i32_81 : i32
    %260 = arith.extui %259 : i1 to i32
    %c15_i32_82 = arith.constant 15 : i32
    %c0_i32_83 = arith.constant 0 : i32
    %261 = arith.cmpi ne, %260, %c0_i32_83 : i32
    scf.if %261 {
      %cst_84 = arith.constant 14.2857141 : f32
      %262 = vector.broadcast %cst_84 : f32 to vector<8x128xf32>
      %263 = arith.mulf %251, %262 : vector<8x128xf32>
      %cst_85 = arith.constant dense<0xFF800000> : vector<8xf32>
      %264 = vector.multi_reduction <maximumf>, %263, %cst_85 [1] : vector<8x128xf32> to vector<8xf32>
      %265 = vector.shape_cast %264 : vector<8xf32> to vector<8x1xf32>
      %266 = vector.broadcast %265 : vector<8x1xf32> to vector<8x128xf32>
      %267 = arith.subf %263, %266 : vector<8x128xf32>
      %268 = math.exp %267 : vector<8x128xf32>
      %cst_86 = arith.constant dense<0.000000e+00> : vector<8xf32>
      %269 = vector.multi_reduction <add>, %268, %cst_86 [1] : vector<8x128xf32> to vector<8xf32>
      %270 = vector.shape_cast %269 : vector<8xf32> to vector<8x1xf32>
      %271 = tpu.reciprocal %270 {approx = true} : vector<8x1xf32> -> vector<8x1xf32>
      %272 = arith.mulf %270, %271 : vector<8x1xf32>
      %cst_87 = arith.constant 2.000000e+00 : f32
      %273 = vector.broadcast %cst_87 : f32 to vector<8x1xf32>
      %274 = arith.subf %273, %272 : vector<8x1xf32>
      %275 = arith.mulf %271, %274 : vector<8x1xf32>
      %276 = vector.broadcast %275 : vector<8x1xf32> to vector<8x128xf32>
      %277 = arith.mulf %268, %276 : vector<8x128xf32>
      %278 = vector.broadcast %c15_i32_82 : i32 to vector<8x128xi32>
      %279 = arith.andi %256, %278 : vector<8x128xi32>
      %cst_88 = arith.constant 0.000000e+00 : f32
      %280 = vector.broadcast %cst_88 : f32 to vector<8x128xf32>
      %c0_i32_89 = arith.constant 0 : i32
      %281 = vector.broadcast %c0_i32_89 : i32 to vector<8x128xi32>
      %282 = arith.cmpi eq, %22, %281 : vector<8x128xi32>
      %cst_90 = arith.constant 0.000000e+00 : f32
      %283 = vector.broadcast %cst_90 : f32 to vector<8x128xf32>
      %284 = arith.select %282, %277, %283 : vector<8x128xi1>, vector<8x128xf32>
      %cst_91 = arith.constant dense<0.000000e+00> : vector<8xf32>
      %285 = vector.multi_reduction <add>, %284, %cst_91 [1] : vector<8x128xf32> to vector<8xf32>
      %286 = vector.shape_cast %285 : vector<8xf32> to vector<8x1xf32>
      %c0_i32_92 = arith.constant 0 : i32
      %287 = vector.broadcast %c0_i32_92 : i32 to vector<8x128xi32>
      %288 = arith.select %282, %279, %287 : vector<8x128xi1>, vector<8x128xi32>
      %cst_93 = arith.constant dense<-2147483648> : vector<8xi32>
      %289 = vector.multi_reduction <maxsi>, %288, %cst_93 [1] : vector<8x128xi32> to vector<8xi32>
      %290 = vector.shape_cast %289 : vector<8xi32> to vector<8x1xi32>
      %291 = vector.broadcast %290 : vector<8x1xi32> to vector<8x128xi32>
      %292 = arith.cmpi eq, %291, %23 : vector<8x128xi32>
      %293 = vector.broadcast %286 : vector<8x1xf32> to vector<8x128xf32>
      %294 = arith.addf %280, %293 : vector<8x128xf32>
      %295 = arith.select %292, %294, %280 : vector<8x128xi1>, vector<8x128xf32>
      %c8_94 = arith.constant 8 : index
      %c0_95 = arith.constant 0 : index
      %296 = vector.load %arg5[%c8_94, %c0_95] : memref<16x384xf32, #tpu.memory_space<vmem>>, vector<8x128xf32>
      tpu.vector_store %arg5[%c8_94, %c0_95], %295 {strides = array<i32>} : memref<16x384xf32, #tpu.memory_space<vmem>>, vector<8x128xf32>,
      %c1_i32_96 = arith.constant 1 : i32
      %297 = vector.broadcast %c1_i32_96 : i32 to vector<8x128xi32>
      %298 = arith.cmpi eq, %22, %297 : vector<8x128xi32>
      %cst_97 = arith.constant 0.000000e+00 : f32
      %299 = vector.broadcast %cst_97 : f32 to vector<8x128xf32>
      %300 = arith.select %298, %277, %299 : vector<8x128xi1>, vector<8x128xf32>
      %cst_98 = arith.constant dense<0.000000e+00> : vector<8xf32>
      %301 = vector.multi_reduction <add>, %300, %cst_98 [1] : vector<8x128xf32> to vector<8xf32>
      %302 = vector.shape_cast %301 : vector<8xf32> to vector<8x1xf32>
      %c0_i32_99 = arith.constant 0 : i32
      %303 = vector.broadcast %c0_i32_99 : i32 to vector<8x128xi32>
      %304 = arith.select %298, %279, %303 : vector<8x128xi1>, vector<8x128xi32>
      %cst_100 = arith.constant dense<-2147483648> : vector<8xi32>
      %305 = vector.multi_reduction <maxsi>, %304, %cst_100 [1] : vector<8x128xi32> to vector<8xi32>
      %306 = vector.shape_cast %305 : vector<8xi32> to vector<8x1xi32>
      %307 = vector.broadcast %306 : vector<8x1xi32> to vector<8x128xi32>
      %308 = arith.cmpi eq, %307, %23 : vector<8x128xi32>
      %309 = vector.broadcast %302 : vector<8x1xf32> to vector<8x128xf32>
      %310 = arith.addf %295, %309 : vector<8x128xf32>
      %311 = arith.select %308, %310, %295 : vector<8x128xi1>, vector<8x128xf32>
      %c2_i32_101 = arith.constant 2 : i32
      %312 = vector.broadcast %c2_i32_101 : i32 to vector<8x128xi32>
      %313 = arith.cmpi eq, %22, %312 : vector<8x128xi32>
      %cst_102 = arith.constant 0.000000e+00 : f32
      %314 = vector.broadcast %cst_102 : f32 to vector<8x128xf32>
      %315 = arith.select %313, %277, %314 : vector<8x128xi1>, vector<8x128xf32>
      %cst_103 = arith.constant dense<0.000000e+00> : vector<8xf32>
      %316 = vector.multi_reduction <add>, %315, %cst_103 [1] : vector<8x128xf32> to vector<8xf32>
      %317 = vector.shape_cast %316 : vector<8xf32> to vector<8x1xf32>
      %c0_i32_104 = arith.constant 0 : i32
      %318 = vector.broadcast %c0_i32_104 : i32 to vector<8x128xi32>
      %319 = arith.select %313, %279, %318 : vector<8x128xi1>, vector<8x128xi32>
      %cst_105 = arith.constant dense<-2147483648> : vector<8xi32>
      %320 = vector.multi_reduction <maxsi>, %319, %cst_105 [1] : vector<8x128xi32> to vector<8xi32>
      %321 = vector.shape_cast %320 : vector<8xi32> to vector<8x1xi32>
      %322 = vector.broadcast %321 : vector<8x1xi32> to vector<8x128xi32>
      %323 = arith.cmpi eq, %322, %23 : vector<8x128xi32>
      %324 = vector.broadcast %317 : vector<8x1xf32> to vector<8x128xf32>
      %325 = arith.addf %311, %324 : vector<8x128xf32>
      %326 = arith.select %323, %325, %311 : vector<8x128xi1>, vector<8x128xf32>
      %c8_106 = arith.constant 8 : index
      %c128 = arith.constant 128 : index
      %327 = vector.load %arg5[%c8_106, %c128] : memref<16x384xf32, #tpu.memory_space<vmem>>, vector<8x128xf32>
      tpu.vector_store %arg5[%c8_106, %c128], %326 {strides = array<i32>} : memref<16x384xf32, #tpu.memory_space<vmem>>, vector<8x128xf32>,
      %c3_i32_107 = arith.constant 3 : i32
      %328 = vector.broadcast %c3_i32_107 : i32 to vector<8x128xi32>
      %329 = arith.cmpi eq, %22, %328 : vector<8x128xi32>
      %cst_108 = arith.constant 0.000000e+00 : f32
      %330 = vector.broadcast %cst_108 : f32 to vector<8x128xf32>
      %331 = arith.select %329, %277, %330 : vector<8x128xi1>, vector<8x128xf32>
      %cst_109 = arith.constant dense<0.000000e+00> : vector<8xf32>
      %332 = vector.multi_reduction <add>, %331, %cst_109 [1] : vector<8x128xf32> to vector<8xf32>
      %333 = vector.shape_cast %332 : vector<8xf32> to vector<8x1xf32>
      %c0_i32_110 = arith.constant 0 : i32
      %334 = vector.broadcast %c0_i32_110 : i32 to vector<8x128xi32>
      %335 = arith.select %329, %279, %334 : vector<8x128xi1>, vector<8x128xi32>
      %cst_111 = arith.constant dense<-2147483648> : vector<8xi32>
      %336 = vector.multi_reduction <maxsi>, %335, %cst_111 [1] : vector<8x128xi32> to vector<8xi32>
      %337 = vector.shape_cast %336 : vector<8xi32> to vector<8x1xi32>
      %338 = vector.broadcast %337 : vector<8x1xi32> to vector<8x128xi32>
      %339 = arith.cmpi eq, %338, %23 : vector<8x128xi32>
      %340 = vector.broadcast %333 : vector<8x1xf32> to vector<8x128xf32>
      %341 = arith.addf %326, %340 : vector<8x128xf32>
      %342 = arith.select %339, %341, %326 : vector<8x128xi1>, vector<8x128xf32>
      %c4_i32_112 = arith.constant 4 : i32
      %343 = vector.broadcast %c4_i32_112 : i32 to vector<8x128xi32>
      %344 = arith.cmpi eq, %22, %343 : vector<8x128xi32>
      %cst_113 = arith.constant 0.000000e+00 : f32
      %345 = vector.broadcast %cst_113 : f32 to vector<8x128xf32>
      %346 = arith.select %344, %277, %345 : vector<8x128xi1>, vector<8x128xf32>
      %cst_114 = arith.constant dense<0.000000e+00> : vector<8xf32>
      %347 = vector.multi_reduction <add>, %346, %cst_114 [1] : vector<8x128xf32> to vector<8xf32>
      %348 = vector.shape_cast %347 : vector<8xf32> to vector<8x1xf32>
      %c0_i32_115 = arith.constant 0 : i32
      %349 = vector.broadcast %c0_i32_115 : i32 to vector<8x128xi32>
      %350 = arith.select %344, %279, %349 : vector<8x128xi1>, vector<8x128xi32>
      %cst_116 = arith.constant dense<-2147483648> : vector<8xi32>
      %351 = vector.multi_reduction <maxsi>, %350, %cst_116 [1] : vector<8x128xi32> to vector<8xi32>
      %352 = vector.shape_cast %351 : vector<8xi32> to vector<8x1xi32>
      %353 = vector.broadcast %352 : vector<8x1xi32> to vector<8x128xi32>
      %354 = arith.cmpi eq, %353, %23 : vector<8x128xi32>
      %355 = vector.broadcast %348 : vector<8x1xf32> to vector<8x128xf32>
      %356 = arith.addf %342, %355 : vector<8x128xf32>
      %357 = arith.select %354, %356, %342 : vector<8x128xi1>, vector<8x128xf32>
      %c8_117 = arith.constant 8 : index
      %c256 = arith.constant 256 : index
      %358 = vector.load %arg5[%c8_117, %c256] : memref<16x384xf32, #tpu.memory_space<vmem>>, vector<8x128xf32>
      tpu.vector_store %arg5[%c8_117, %c256], %357 {strides = array<i32>} : memref<16x384xf32, #tpu.memory_space<vmem>>, vector<8x128xf32>,
    } else {
    }
    return
  }
  func.func @transform_0(%arg0: i32, %arg1: i32) -> (i32, i32) {
    %c0_i32 = arith.constant 0 : i32
    %c0_i32_0 = arith.constant 0 : i32
    return %arg0, %c0_i32 : i32, i32
  }
  func.func @transform_1(%arg0: i32, %arg1: i32) -> (i32, i32) {
    %c0_i32 = arith.constant 0 : i32
    %c0_i32_0 = arith.constant 0 : i32
    return %c0_i32, %arg1 : i32, i32
  }
  func.func @transform_2(%arg0: i32, %arg1: i32) -> (i32, i32) {
    %c0_i32 = arith.constant 0 : i32
    %c0_i32_0 = arith.constant 0 : i32
    return %c0_i32, %arg1 : i32, i32
  }
  func.func @transform_3(%arg0: i32, %arg1: i32) -> (i32, i32) {
    %c0_i32 = arith.constant 0 : i32
    %c0_i32_0 = arith.constant 0 : i32
    return %arg0, %c0_i32 : i32, i32
  }
}

</mosaic_0001>

<llo_original>
// kernel: tpu_custom_call.1
$region0: #{tpu_custom_call.1}
  #allocation0 [shape = 'u32[]', space=smem, size = 0x4, offset = 0x4, fixed_abs, tag = 'smem constant byte address 0x4 - core index']
  #allocation1 [shape = 'u32[144,128]{1,0:T(1,128)}', space=vmem, size = 0x12000, scoped, tag = 'internal scratch']
  #allocation2 [shape = 'f32[16,128]{1,0:T(8,128)}', space=vmem, size = 0x2000, scoped, tag = 'scratch operand']
  #allocation3 [shape = 's32[16,128]{1,0:T(8,128)}', space=vmem, size = 0x2000, scoped, tag = 'scratch operand']
  %s0 = inlined_call_operand.hbm [shape: bf16[32,256], index: 0, kind: input, shape index: {}]
  %s1 = inlined_call_operand.hbm [shape: bf16[256,1024], index: 1, kind: input, shape index: {}]
  %s2 = inlined_call_operand.hbm [shape: s32[1,1024], index: 2, kind: input, shape index: {}]
  %s3 = inlined_call_operand.hbm [shape: f32[32,384], index: 3, kind: output, shape index: {}]
  %s4 = sld [smem:[#allocation0]]
  $region69: #{tpu_custom_call.1} parent=0
    _
  %s6 = ssub.s32 1, %s4
  %s7 = scalar_select 0, %s6, %s4
  $region1: #{tpu_custom_call.1} parent=0
    #allocation4 [shape = 'u8[16384]{0}', space=vmem, size = 0x4000, scoped, tag = 'input window, operand 0']
    #allocation5 [shape = 's32[2]{0}', space=sflag, size = 0x8, scoped, tag = 'scoped memory for tpu_custom_call.1']
    #allocation6 [shape = 's32[2]{0}', space=sflag, size = 0x8, scoped, tag = 'scoped memory for tpu_custom_call.1']
    #allocation7 [shape = 'u8[262144]{0}', space=vmem, size = 0x40000, scoped, tag = 'input window, operand 1']
    #allocation8 [shape = 's32[2]{0}', space=sflag, size = 0x8, scoped, tag = 'scoped memory for tpu_custom_call.1']
    #allocation9 [shape = 'u8[2048]{0}', space=vmem, size = 0x800, scoped, tag = 'input window, operand 2']
    #allocation10 [shape = 'u8[49152]{0}', space=vmem, size = 0xc000, scoped, tag = 'output window, operand 0']
    %8 = vsyncpa [#allocation5], 0
    %s9 = scalar_lea.sflag [#allocation5], 1
    %10 = vsyncpa %s9, 0
    %11 = vsyncpa [#allocation8], 0
    %s12 = scalar_lea.sflag [#allocation8], 1
    %13 = vsyncpa %s12, 0
    %14 = vsyncpa [#allocation6], 0
    %s15 = scalar_lea.sflag [#allocation6], 1
    %16 = vsyncpa %s15, 0
    loop: start=0, step=1, limit=10
    $region2: #{tpu_custom_call.1} parent=1 // loop_pre_header
      _
    $region3: #{tpu_custom_call.1} parent=1 // loop_header
      %s18 = sphi 0, %s22
      %p19 = scmp.ge.s32.totalorder %s18, 10
      %s25 = sphi 0, %s37
      %s26 = sphi 0, %s33
      %s27 = sphi 0, %s25
      %s28 = sphi 0, %s26
      %s29 = sphi 0, %s27
      %s30 = sphi 0, %s28
      %s40 = sphi 0, %s42
      %s43 = sphi 0, %s40
      %s44 = sphi 0, %s43
      %s60 = sphi 0, %s44
      %s66 = sphi 0, %s68
      %s69 = sphi 0, %s66
      %s70 = sphi 0, %s69
      %s86 = sphi 0, %s70
      %s92 = sphi 0, %s94
      %s95 = sphi 0, %s92
      %s96 = sphi 0, %s95
      %s112 = sphi 0, %s96
      %s118 = sphi 0, %s120
      %s121 = sphi 0, %s118
      %s122 = sphi 0, %s121
      %s138 = sphi 0, %s122
    $region4: #{tpu_custom_call.1} parent=1 // loop_header_branch
      %21 = sbr.rel (%p19) target = $region8
    $region5: #{tpu_custom_call.1} parent=1 // loop_body
      %s23 = ssub.s32 %s18, 1
      %s24 = ssub.s32 %s18, 2
      %s31 = sadd.s32 1, %s26
      %p32 = scmp.ge.s32.totalorder %s31, 4
      %s33 = scalar_select %p32, 0, %s31
      %s34 = sadd.s32 1, %s25
      %s35 = scalar_select %p32, %s34, %s25
      %p36 = scmp.ge.s32.totalorder %s35, 2
      %s37 = scalar_select %p36, 0, %s35
      %s38 = ssub.s32 %s25, %s37
      %p39 = scmp.eq.s32.totalorder %s38, 0
      %s41 = sadd.s32 %s40, 1
      %s42 = scalar_select %p39, %s40, %s41
      %p45 = pneg %p39
      %p46 = scmp.eq.s32.totalorder %s18, 7
      %p47 = por %p45, %p46
      %p48 = scmp.ne.s32.totalorder %s40, %s43
      %p49 = scmp.eq.s32.totalorder %s18, 0
      %p50 = por %p48, %p49
      %p51 = scmp.ne.s32.totalorder %s40, %s43
      %p52 = scmp.eq.s32.totalorder %s23, 7
      %p53 = por %p51, %p52
      %p54 = scmp.ne.s32.totalorder %s43, %s44
      %p55 = scmp.eq.s32.totalorder %s23, 0
      %p56 = por %p54, %p55
      %p57 = scmp.ne.s32.totalorder %s43, %s44
      %p58 = scmp.eq.s32.totalorder %s24, 7
      %p59 = por %p57, %p58
      %p61 = scmp.ne.s32.totalorder %s44, %s60
      %p62 = scmp.eq.s32.totalorder %s24, 0
      %p63 = por %p61, %p62
      %s64 = ssub.s32 %s26, %s33
      %p65 = scmp.eq.s32.totalorder %s64, 0
      %s67 = sadd.s32 %s66, 1
      %s68 = scalar_select %p65, %s66, %s67
      %p71 = pneg %p65
      %p72 = scmp.eq.s32.totalorder %s18, 7
      %p73 = por %p71, %p72
      %p74 = scmp.ne.s32.totalorder %s66, %s69
      %p75 = scmp.eq.s32.totalorder %s18, 0
      %p76 = por %p74, %p75
      %p77 = scmp.ne.s32.totalorder %s66, %s69
      %p78 = scmp.eq.s32.totalorder %s23, 7
      %p79 = por %p77, %p78
      %p80 = scmp.ne.s32.totalorder %s69, %s70
      %p81 = scmp.eq.s32.totalorder %s23, 0
      %p82 = por %p80, %p81
      %p83 = scmp.ne.s32.totalorder %s69, %s70
      %p84 = scmp.eq.s32.totalorder %s24, 7
      %p85 = por %p83, %p84
      %p87 = scmp.ne.s32.totalorder %s70, %s86
      %p88 = scmp.eq.s32.totalorder %s24, 0
      %p89 = por %p87, %p88
      %s90 = ssub.s32 %s26, %s33
      %p91 = scmp.eq.s32.totalorder %s90, 0
      %s93 = sadd.s32 %s92, 1
      %s94 = scalar_select %p91, %s92, %s93
      %p97 = pneg %p91
      %p98 = scmp.eq.s32.totalorder %s18, 7
      %p99 = por %p97, %p98
      %p100 = scmp.ne.s32.totalorder %s92, %s95
      %p101 = scmp.eq.s32.totalorder %s18, 0
      %p102 = por %p100, %p101
      %p103 = scmp.ne.s32.totalorder %s92, %s95
      %p104 = scmp.eq.s32.totalorder %s23, 7
      %p105 = por %p103, %p104
      %p106 = scmp.ne.s32.totalorder %s95, %s96
      %p107 = scmp.eq.s32.totalorder %s23, 0
      %p108 = por %p106, %p107
      %p109 = scmp.ne.s32.totalorder %s95, %s96
      %p110 = scmp.eq.s32.totalorder %s24, 7
      %p111 = por %p109, %p110
      %p113 = scmp.ne.s32.totalorder %s96, %s112
      %p114 = scmp.eq.s32.totalorder %s24, 0
      %p115 = por %p113, %p114
      %s116 = ssub.s32 %s25, %s37
      %p117 = scmp.eq.s32.totalorder %s116, 0
      %s119 = sadd.s32 %s118, 1
      %s120 = scalar_select %p117, %s118, %s119
      %p123 = pneg %p117
      %p124 = scmp.eq.s32.totalorder %s18, 7
      %p125 = por %p123, %p124
      %p126 = scmp.ne.s32.totalorder %s118, %s121
      %p127 = scmp.eq.s32.totalorder %s18, 0
      %p128 = por %p126, %p127
      %p129 = scmp.ne.s32.totalorder %s118, %s121
      %p130 = scmp.eq.s32.totalorder %s23, 7
      %p131 = por %p129, %p130
      %p132 = scmp.ne.s32.totalorder %s121, %s122
      %p133 = scmp.eq.s32.totalorder %s23, 0
      %p134 = por %p132, %p133
      %p135 = scmp.ne.s32.totalorder %s121, %s122
      %p136 = scmp.eq.s32.totalorder %s24, 7
      %p137 = por %p135, %p136
      %p139 = scmp.ne.s32.totalorder %s122, %s138
      %p140 = scmp.eq.s32.totalorder %s24, 0
      %p141 = por %p139, %p140
      %p142 = scmp.le.s32.totalorder 1, %s18
      %p143 = scmp.lt.s32.totalorder %s18, 9
      %p144 = pnand %p142, %p143
      %p145 = pneg %p144
      // Predicated region
      $region9: #{tpu_custom_call.1} parent=5 // pred_check
        _
      $region10: #{tpu_custom_call.1} parent=5 // pred_check_branch
        %147 = sbr.rel (%p144) target = $region12
      $region11: #{tpu_custom_call.1} parent=5 // pred_region
        %s148 = ssub.s32 %s18, 1
      $region12: #{tpu_custom_call.1} parent=5 // pred_fallthru
        _
      %p149 = scmp.lt.s32.totalorder %s18, 8
      // Predicated region
      $region13: #{tpu_custom_call.1} parent=5 // pred_check
        %p150 = pneg %p149
      $region14: #{tpu_custom_call.1} parent=5 // pred_check_branch
        %152 = sbr.rel (%p150) target = $region16
      $region15: #{tpu_custom_call.1} parent=5 // pred_region
        // Predicated region
        $region17: #{tpu_custom_call.1} parent=15 // pred_check
          %p153 = pneg %p50
        $region18: #{tpu_custom_call.1} parent=15 // pred_check_branch
          %155 = sbr.rel (%p153) target = $region20
        $region19: #{tpu_custom_call.1} parent=15 // pred_region
          %s156 = sand.u32 %s40, 1
          %s157 = scalar_lea.sflag [#allocation5], %s156
          %s158 = sand.u32 %s40, 1
          %s159 = smul.addr %s158, 16
          %s160 = scalar_lea.vmem [#allocation4], %s159
          %s161 = smul.u32 2, %s25
          %s163 = ssub.s32 256, 256
          %164 = vsyncadd %s157, %s163
          %s165 = smul.addr %s161, 2
          %s166 = smul.addr %s165, 64
          %s167 = scalar_lea.hbm %s0, %s166
          %s168 = sshll.u32 %s160, 4
          %s169 = int_to_ptr.vmem [resolvable:$true] %s168
          %174 = dma.hbm_to_vmem [thread:$0]  %s167, 256, %s169, %s157, 128, 128, 8
        $region20: #{tpu_custom_call.1} parent=15 // pred_fallthru
          _
        // Predicated region
        $region21: #{tpu_custom_call.1} parent=15 // pred_check
          %p175 = pneg %p76
        $region22: #{tpu_custom_call.1} parent=15 // pred_check_branch
          %177 = sbr.rel (%p175) target = $region24
        $region23: #{tpu_custom_call.1} parent=15 // pred_region
          %s178 = sand.u32 %s18, 1
          %s179 = scalar_lea.sflag [#allocation8], %s178
          %s180 = sand.u32 %s66, 1
          %s181 = smul.addr %s180, 256
          %s182 = scalar_lea.vmem [#allocation7], %s181
          %s183 = smul.u32 2, %s26
          %s185 = ssub.s32 4096, 4096
          %186 = vsyncadd %s179, %s185
          %s187 = smul.addr %s183, 64
          %s188 = scalar_lea.hbm %s1, %s187
          %s189 = sshll.u32 %s182, 4
          %s190 = int_to_ptr.vmem [resolvable:$true] %s189
          %195 = dma.hbm_to_vmem [thread:$0]  %s188, 4096, %s190, %s179, 512, 128, 8
        $region24: #{tpu_custom_call.1} parent=15 // pred_fallthru
          _
        // Predicated region
        $region25: #{tpu_custom_call.1} parent=15 // pred_check
          %p196 = pneg %p102
        $region26: #{tpu_custom_call.1} parent=15 // pred_check_branch
          %198 = sbr.rel (%p196) target = $region28
        $region27: #{tpu_custom_call.1} parent=15 // pred_region
          %s199 = sand.u32 %s18, 1
          %s200 = scalar_lea.sflag [#allocation8], %s199
          %s201 = sand.u32 %s92, 1
          %s202 = smul.addr %s201, 2
          %s203 = scalar_lea.vmem [#allocation9], %s202
          %s204 = smul.u32 2, %s26
          %s206 = ssub.s32 32, 32
          %207 = vsyncadd %s200, %s206
          %s208 = smul.addr %s204, 16
          %s209 = scalar_lea.hbm %s2, %s208
          %s211 = sshll.u32 %s203, 4
          %s212 = int_to_ptr.vmem [resolvable:$true] %s211
          %214 = dma.hbm_to_vmem [thread:$0]  %s209, 32, %s212, %s200
        $region28: #{tpu_custom_call.1} parent=15 // pred_fallthru
          _
      $region16: #{tpu_custom_call.1} parent=5 // pred_fallthru
        _
      %p215 = scmp.le.s32.totalorder 1, %s18
      %p216 = scmp.lt.s32.totalorder %s18, 9
      %p217 = pnand %p215, %p216
      %p218 = pneg %p217
      // Predicated region
      $region29: #{tpu_custom_call.1} parent=5 // pred_check
        _
      $region30: #{tpu_custom_call.1} parent=5 // pred_check_branch
        %220 = sbr.rel (%p217) target = $region32
      $region31: #{tpu_custom_call.1} parent=5 // pred_region
        %s221 = ssub.s32 %s18, 1
        %s222 = sand.u32 %s43, 1
        %s223 = scalar_lea.sflag [#allocation5], %s222
        %s224 = sand.u32 %s43, 1
        %s225 = smul.addr %s224, 16
        %s226 = scalar_lea.vmem [#allocation4], %s225
        // Predicated region
        $region33: #{tpu_custom_call.1} parent=31 // pred_check
          %p227 = pneg %p56
        $region34: #{tpu_custom_call.1} parent=31 // pred_check_branch
          %229 = sbr.rel (%p227) target = $region36
        $region35: #{tpu_custom_call.1} parent=31 // pred_region
          %230 = dma.done %s223, 256
        $region36: #{tpu_custom_call.1} parent=31 // pred_fallthru
          _
        %s231 = sand.u32 %s23, 1
        %s232 = scalar_lea.sflag [#allocation8], %s231
        %s233 = sand.u32 %s69, 1
        %s234 = smul.addr %s233, 256
        %s235 = scalar_lea.vmem [#allocation7], %s234
        // Predicated region
        $region37: #{tpu_custom_call.1} parent=31 // pred_check
          %p236 = pneg %p82
        $region38: #{tpu_custom_call.1} parent=31 // pred_check_branch
          %238 = sbr.rel (%p236) target = $region40
        $region39: #{tpu_custom_call.1} parent=31 // pred_region
          %239 = dma.done %s232, 4096
        $region40: #{tpu_custom_call.1} parent=31 // pred_fallthru
          _
        %s240 = sand.u32 %s23, 1
        %s241 = scalar_lea.sflag [#allocation8], %s240
        %s242 = sand.u32 %s95, 1
        %s243 = smul.addr %s242, 2
        %s244 = scalar_lea.vmem [#allocation9], %s243
        // Predicated region
        $region41: #{tpu_custom_call.1} parent=31 // pred_check
          %p245 = pneg %p108
        $region42: #{tpu_custom_call.1} parent=31 // pred_check_branch
          %247 = sbr.rel (%p245) target = $region44
        $region43: #{tpu_custom_call.1} parent=31 // pred_region
          %248 = dma.done %s241, 32
        $region44: #{tpu_custom_call.1} parent=31 // pred_fallthru
          _
        %s249 = sand.u32 %s43, 1
        %s250 = scalar_lea.sflag [#allocation5], %s249
        %s251 = sand.u32 %s43, 1
        %s252 = smul.addr %s251, 16
        %s253 = scalar_lea.vmem [#allocation4], %s252
        %p254 = pneg %p56
        %p255 = pneg %p53
        %s256 = sand.u32 %s23, 1
        %s257 = scalar_lea.sflag [#allocation8], %s256
        %s258 = sand.u32 %s69, 1
        %s259 = smul.addr %s258, 256
        %s260 = scalar_lea.vmem [#allocation7], %s259
        %p261 = pneg %p82
        %p262 = pneg %p79
        %s263 = sand.u32 %s23, 1
        %s264 = scalar_lea.sflag [#allocation8], %s263
        %s265 = sand.u32 %s95, 1
        %s266 = smul.addr %s265, 2
        %s267 = scalar_lea.vmem [#allocation9], %s266
        %p268 = pneg %p108
        %p269 = pneg %p105
        %p270 = pneg %p134
        %p271 = pneg %p131
        %s272 = sand.u32 %s121, 1
        %s273 = scalar_lea.sflag [#allocation6], %s272
        %s274 = sand.u32 %s121, 1
        %s275 = smul.addr %s274, 48
        %s276 = scalar_lea.vmem [#allocation10], %s275
        %s277 = smul.u32 2, %s27
        %s278 = smul.u32 2, %s28
        %s279 = smul.u32 2, %s28
        %s280 = smul.u32 2, %s27
        %p281 = scmp.eq.s32.totalorder %s28, 0
        // Predicated region
        $region45: #{tpu_custom_call.1} parent=31 // pred_check
          %p282 = pneg %p281
        $region46: #{tpu_custom_call.1} parent=31 // pred_check_branch
          %284 = sbr.rel (%p282) target = $region48
        $region47: #{tpu_custom_call.1} parent=31 // pred_region
          %v285 = vlaneseq
          %v286 = vand.u32 %v285, 127
          %287 = vst [vmem:[#allocation2] sm:$0xff] -inf
          %288 = vst [vmem:[#allocation2 + $0x8] sm:$0xff] -inf
          %v289 = vadd.s32 %v286, 16384
          %290 = vst [vmem:[#allocation3] sm:$0xff] %v289
          %291 = vst [vmem:[#allocation3 + $0x8] sm:$0xff] %v289
        $region48: #{tpu_custom_call.1} parent=31 // pred_fallthru
          _
        %v292 = vld [vmem:[%s226] sm:$0xff]
        %v293 = vld [vmem:[%s226 + $0x8] sm:$0xff]
        %v294 = vld [vmem:[%s235] sm:$0xff]
        %v295 = vld [vmem:[%s235 + $0x8] sm:$0xff]
        %v296 = vld [vmem:[%s235 + $0x10] sm:$0xff]
        %v297 = vld [vmem:[%s235 + $0x18] sm:$0xff]
        %v298 = vld [vmem:[%s235 + $0x20] sm:$0xff]
        %v299 = vld [vmem:[%s235 + $0x28] sm:$0xff]
        %v300 = vld [vmem:[%s235 + $0x30] sm:$0xff]
        %v301 = vld [vmem:[%s235 + $0x38] sm:$0xff]
        %v302 = vld [vmem:[%s235 + $0x40] sm:$0xff]
        %v303 = vld [vmem:[%s235 + $0x48] sm:$0xff]
        %v304 = vld [vmem:[%s235 + $0x50] sm:$0xff]
        %v305 = vld [vmem:[%s235 + $0x58] sm:$0xff]
        %v306 = vld [vmem:[%s235 + $0x60] sm:$0xff]
        %v307 = vld [vmem:[%s235 + $0x68] sm:$0xff]
        %v308 = vld [vmem:[%s235 + $0x70] sm:$0xff]
        %v309 = vld [vmem:[%s235 + $0x78] sm:$0xff]
        %v310 = vld [vmem:[%s235 + $0x80] sm:$0xff]
        %v311 = vld [vmem:[%s235 + $0x88] sm:$0xff]
        %v312 = vld [vmem:[%s235 + $0x90] sm:$0xff]
        %v313 = vld [vmem:[%s235 + $0x98] sm:$0xff]
        %v314 = vld [vmem:[%s235 + $0xa0] sm:$0xff]
        %v315 = vld [vmem:[%s235 + $0xa8] sm:$0xff]
        %v316 = vld [vmem:[%s235 + $0xb0] sm:$0xff]
        %v317 = vld [vmem:[%s235 + $0xb8] sm:$0xff]
        %v318 = vld [vmem:[%s235 + $0xc0] sm:$0xff]
        %v319 = vld [vmem:[%s235 + $0xc8] sm:$0xff]
        %v320 = vld [vmem:[%s235 + $0xd0] sm:$0xff]
        %v321 = vld [vmem:[%s235 + $0xd8] sm:$0xff]
        %v322 = vld [vmem:[%s235 + $0xe0] sm:$0xff]
        %v323 = vld [vmem:[%s235 + $0xe8] sm:$0xff]
        %v324 = vld [vmem:[%s235 + $0xf0] sm:$0xff]
        %v325 = vld [vmem:[%s235 + $0xf8] sm:$0xff]
        %v328 = vunpack.c.l.b16 %v292
        %v329 = vunpack.c.h.b16 %v292
        %v330 = vunpack.c.l.b16 %v293
        %v331 = vunpack.c.h.b16 %v293
        %v332 = vpack.c.b16 %v330, %v328
        %v333 = vpack.c.b16 %v331, %v329
        %v368 = vunpack.c.l.b16 %v294
        %v369 = vunpack.c.h.b16 %v294
        %v370 = vunpack.c.l.b16 %v295
        %v371 = vunpack.c.h.b16 %v295
        %v372 = vunpack.c.l.b16 %v296
        %v373 = vunpack.c.h.b16 %v296
        %v374 = vunpack.c.l.b16 %v297
        %v375 = vunpack.c.h.b16 %v297
        %v376 = vunpack.c.l.b16 %v298
        %v377 = vunpack.c.h.b16 %v298
        %v378 = vunpack.c.l.b16 %v299
        %v379 = vunpack.c.h.b16 %v299
        %v380 = vunpack.c.l.b16 %v300
        %v381 = vunpack.c.h.b16 %v300
        %v382 = vunpack.c.l.b16 %v301
        %v383 = vunpack.c.h.b16 %v301
        %v384 = vunpack.c.l.b16 %v302
        %v385 = vunpack.c.h.b16 %v302
        %v386 = vunpack.c.l.b16 %v303
        %v387 = vunpack.c.h.b16 %v303
        %v388 = vunpack.c.l.b16 %v304
        %v389 = vunpack.c.h.b16 %v304
        %v390 = vunpack.c.l.b16 %v305
        %v391 = vunpack.c.h.b16 %v305
        %v392 = vunpack.c.l.b16 %v306
        %v393 = vunpack.c.h.b16 %v306
        %v394 = vunpack.c.l.b16 %v307
        %v395 = vunpack.c.h.b16 %v307
        %v396 = vunpack.c.l.b16 %v308
        %v397 = vunpack.c.h.b16 %v308
        %v398 = vunpack.c.l.b16 %v309
        %v399 = vunpack.c.h.b16 %v309
        %v400 = vunpack.c.l.b16 %v310
        %v401 = vunpack.c.h.b16 %v310
        %v402 = vunpack.c.l.b16 %v311
        %v403 = vunpack.c.h.b16 %v311
        %v404 = vunpack.c.l.b16 %v312
        %v405 = vunpack.c.h.b16 %v312
        %v406 = vunpack.c.l.b16 %v313
        %v407 = vunpack.c.h.b16 %v313
        %v408 = vunpack.c.l.b16 %v314
        %v409 = vunpack.c.h.b16 %v314
        %v410 = vunpack.c.l.b16 %v315
        %v411 = vunpack.c.h.b16 %v315
        %v412 = vunpack.c.l.b16 %v316
        %v413 = vunpack.c.h.b16 %v316
        %v414 = vunpack.c.l.b16 %v317
        %v415 = vunpack.c.h.b16 %v317
        %v416 = vunpack.c.l.b16 %v318
        %v417 = vunpack.c.h.b16 %v318
        %v418 = vunpack.c.l.b16 %v319
        %v419 = vunpack.c.h.b16 %v319
        %v420 = vunpack.c.l.b16 %v320
        %v421 = vunpack.c.h.b16 %v320
        %v422 = vunpack.c.l.b16 %v321
        %v423 = vunpack.c.h.b16 %v321
        %v424 = vunpack.c.l.b16 %v322
        %v425 = vunpack.c.h.b16 %v322
        %v426 = vunpack.c.l.b16 %v323
        %v427 = vunpack.c.h.b16 %v323
        %v428 = vunpack.c.l.b16 %v324
        %v429 = vunpack.c.h.b16 %v324
        %v430 = vunpack.c.l.b16 %v325
        %v431 = vunpack.c.h.b16 %v325
        %v432 = vpack.c.b16 %v370, %v368
        %v433 = vpack.c.b16 %v371, %v369
        %v434 = vpack.c.b16 %v374, %v372
        %v435 = vpack.c.b16 %v375, %v373
        %v436 = vpack.c.b16 %v378, %v376
        %v437 = vpack.c.b16 %v379, %v377
        %v438 = vpack.c.b16 %v382, %v380
        %v439 = vpack.c.b16 %v383, %v381
        %v440 = vpack.c.b16 %v386, %v384
        %v441 = vpack.c.b16 %v387, %v385
        %v442 = vpack.c.b16 %v390, %v388
        %v443 = vpack.c.b16 %v391, %v389
        %v444 = vpack.c.b16 %v394, %v392
        %v445 = vpack.c.b16 %v395, %v393
        %v446 = vpack.c.b16 %v398, %v396
        %v447 = vpack.c.b16 %v399, %v397
        %v448 = vpack.c.b16 %v402, %v400
        %v449 = vpack.c.b16 %v403, %v401
        %v450 = vpack.c.b16 %v406, %v404
        %v451 = vpack.c.b16 %v407, %v405
        %v452 = vpack.c.b16 %v410, %v408
        %v453 = vpack.c.b16 %v411, %v409
        %v454 = vpack.c.b16 %v414, %v412
        %v455 = vpack.c.b16 %v415, %v413
        %v456 = vpack.c.b16 %v418, %v416
        %v457 = vpack.c.b16 %v419, %v417
        %v458 = vpack.c.b16 %v422, %v420
        %v459 = vpack.c.b16 %v423, %v421
        %v460 = vpack.c.b16 %v426, %v424
        %v461 = vpack.c.b16 %v427, %v425
        %v462 = vpack.c.b16 %v430, %v428
        %v463 = vpack.c.b16 %v431, %v429
        %496 = vmatprep.subr.bf16.mxu0 %v447
        %497 = vmatpush1.bf16.msra.mxu0 %v446
        %498 = vmatprep.subr.bf16.mxu0 %v445
        %499 = vmatpush1.bf16.msra.mxu0 %v444
        %500 = vmatprep.subr.bf16.mxu0 %v443
        %501 = vmatpush1.bf16.msra.mxu0 %v442
        %502 = vmatprep.subr.bf16.mxu0 %v441
        %503 = vmatpush1.bf16.msra.mxu0 %v440
        %504 = vmatprep.subr.bf16.mxu0 %v439
        %505 = vmatpush1.bf16.msra.mxu0 %v438
        %506 = vmatprep.subr.bf16.mxu0 %v437
        %507 = vmatpush1.bf16.msra.mxu0 %v436
        %508 = vmatprep.subr.bf16.mxu0 %v435
        %509 = vmatpush1.bf16.msra.mxu0 %v434
        %510 = vmatprep.subr.bf16.mxu0 %v433
        %511 = vmatpush1.bf16.msra.mxu0 %v432
        %512 = vmatprep.subr.bf16.mxu0 %v463
        %513 = vmatpush2.bf16.msra.mxu0 %v462
        %514 = vmatprep.subr.bf16.mxu0 %v461
        %515 = vmatpush2.bf16.msra.mxu0 %v460
        %516 = vmatprep.subr.bf16.mxu0 %v459
        %517 = vmatpush2.bf16.msra.mxu0 %v458
        %518 = vmatprep.subr.bf16.mxu0 %v457
        %519 = vmatpush2.bf16.msra.mxu0 %v456
        %520 = vmatprep.subr.bf16.mxu0 %v455
        %521 = vmatpush2.bf16.msra.mxu0 %v454
        %522 = vmatprep.subr.bf16.mxu0 %v453
        %523 = vmatpush2.bf16.msra.mxu0 %v452
        %524 = vmatprep.subr.bf16.mxu0 %v451
        %525 = vmatpush2.bf16.msra.mxu0 %v450
        %526 = vmatprep.subr.bf16.mxu0 %v449
        %527 = vmatpush2.bf16.msra.mxu0 %v448
        %528 = vmatprep.mubr.bf16.mxu0 %v333
        %529 = vmatmul.mubr.bf16.gmra.mxu0 %v332
        %v530 = vpop.f32.mrf.mxu0
        %v531 = vadd.f32 0.0, %v530
        %v532 = vpop.f32.mrf.mxu0
        %v533 = vadd.f32 0.0, %v532
        %v534 = vpop.f32.mrf.mxu0
        %v535 = vadd.f32 0.0, %v534
        %v536 = vpop.f32.mrf.mxu0
        %v537 = vadd.f32 0.0, %v536
        %538 = vdwg.mxu0
        %v539 = vlaneseq
        %v540 = vand.u32 %v539, 127
        %v541 = vadd.s32 %v540, 128
        %s542 = smul.u32 %s28, 256
        %v543 = vstv %s542
        %v544 = vadd.s32 %v543, %v540
        %v545 = vadd.s32 %v543, %v541
        %vm546 = vcmp.lt.s32.totalorder %v544, 1000
        %vm547 = vcmp.lt.s32.totalorder %v545, 1000
        %v548 = vsel %vm546, 1, 0
        %v549 = vsel %vm547, 1, 0
        %vm550 = vcmp.eq.s32.totalorder %v548, 1
        %vm551 = vcmp.eq.s32.totalorder %v549, 1
        %v552 = vsel %vm550, %v531, -inf
        %v553 = vsel %vm551, %v533, -inf
        %v554 = vsel %vm550, %v535, -inf
        %v555 = vsel %vm551, %v537, -inf
        %v556 = vmul.u32 %v544, 16
        %v557 = vmul.u32 %v545, 16
        %v558 = vld [vmem:[%s244] sm:$0x3]
        %v559 = vlaneseq
        %v560 = vshrl.u32 %v559, 7
        %v561 = vsub.s32 0, %v560
        %v562 = vrot.slane %v558, %v561
        %v563 = vlaneseq
        %v564 = vshrl.u32 %v563, 7
        %v565 = vsub.s32 1, %v564
        %v566 = vrot.slane %v558, %v565
        %v567 = vadd.s32 %v556, %v562
        %v568 = vadd.s32 %v557, %v566
        %v569 = vlaneseq
        %v570 = vshrl.u32 %v569, 7
        %v571 = vsub.s32 0, %v570
        %v572 = vrot.slane %v567, %v571
        %v573 = vlaneseq
        %v574 = vshrl.u32 %v573, 7
        %v575 = vsub.s32 0, %v574
        %v576 = vrot.slane %v568, %v575
        %v577 = vld [vmem:[#allocation2] sm:$0xff]
        %v578 = vld [vmem:[#allocation3] sm:$0xff]
        %v579 = vadd.s32 %v540, 16384
        %v580 = vmax.f32 %v577, %v552
        %v581 = vmax.f32 %v580, %v553
        %582 = vmax.xlane.f32.xlu0 %v581
        %v583 = vpop.xlane.xlu0 %582
        %vm584 = vcmp.eq.f32.partialorder %v577, %v583
        %vm585 = vcmp.eq.f32.partialorder %v552, %v583
        %vm586 = vcmp.eq.f32.partialorder %v553, %v583
        %v587 = vsel %vm584, %v578, 2147483647
        %v588 = vsel %vm585, %v572, 2147483647
        %v589 = vsel %vm586, %v576, 2147483647
        %vm590 = vcmp.lt.s32.totalorder %v587, %v588
        %v591 = vsel %vm590, %v587, %v588
        %vm592 = vcmp.lt.s32.totalorder %v591, %v589
        %v593 = vsel %vm592, %v591, %v589
        %v594 = vand.u32 %v593, 65535
        %v595 = vshra.s32 %v593, 16
        %v596 = vcvt.s32.f32 %v594
        %v597 = vcvt.s32.f32 %v595
        %598 = vmin.xlane.f32.xlu0 %v597
        %v599 = vpop.xlane.xlu0 %598
        %vm600 = vcmp.eq.f32.partialorder %v597, %v599
        %v601 = vsel %vm600, %v596, inf
        %602 = vmin.xlane.f32.xlu0 %v601
        %v603 = vpop.xlane.xlu0 %602
        %v604 = vcvt.f32.s32 %v603
        %v605 = vcvt.f32.s32 %v599
        %v606 = vshll.u32 %v605, 16
        %v607 = vadd.s32 %v606, %v604
        %vm608 = vcmp.eq.s32.totalorder %v578, %v607
        %vm609 = vcmp.eq.s32.totalorder %v572, %v607
        %vm610 = vcmp.eq.s32.totalorder %v576, %v607
        %v611 = vsel %vm608, -inf, %v577
        %v612 = vsel %vm609, -inf, %v552
        %v613 = vsel %vm610, -inf, %v553
        %vm614 = vcmp.eq.s32.totalorder %v540, 0
        %v615 = vsel %vm614, %v583, -inf
        %v616 = vsel %vm614, %v607, %v579
        %v617 = vmax.f32 %v611, %v612
        %v618 = vmax.f32 %v617, %v613
        %619 = vmax.xlane.f32.xlu0 %v618
        %v620 = vpop.xlane.xlu0 %619
        %vm621 = vcmp.eq.f32.partialorder %v611, %v620
        %vm622 = vcmp.eq.f32.partialorder %v612, %v620
        %vm623 = vcmp.eq.f32.partialorder %v613, %v620
        %v624 = vsel %vm621, %v578, 2147483647
        %v625 = vsel %vm622, %v572, 2147483647
        %v626 = vsel %vm623, %v576, 2147483647
        %vm627 = vcmp.lt.s32.totalorder %v624, %v625
        %v628 = vsel %vm627, %v624, %v625
        %vm629 = vcmp.lt.s32.totalorder %v628, %v626
        %v630 = vsel %vm629, %v628, %v626
        %v631 = vand.u32 %v630, 65535
        %v632 = vshra.s32 %v630, 16
        %v633 = vcvt.s32.f32 %v631
        %v634 = vcvt.s32.f32 %v632
        %635 = vmin.xlane.f32.xlu0 %v634
        %v636 = vpop.xlane.xlu0 %635
        %vm637 = vcmp.eq.f32.partialorder %v634, %v636
        %v638 = vsel %vm637, %v633, inf
        %639 = vmin.xlane.f32.xlu0 %v638
        %v640 = vpop.xlane.xlu0 %639
        %v641 = vcvt.f32.s32 %v640
        %v642 = vcvt.f32.s32 %v636
        %v643 = vshll.u32 %v642, 16
        %v644 = vadd.s32 %v643, %v641
        %vm645 = vcmp.eq.s32.totalorder %v578, %v644
        %vm646 = vcmp.eq.s32.totalorder %v572, %v644
        %vm647 = vcmp.eq.s32.totalorder %v576, %v644
        %v648 = vsel %vm645, -inf, %v611
        %v649 = vsel %vm646, -inf, %v612
        %v650 = vsel %vm647, -inf, %v613
        %vm651 = vcmp.eq.s32.totalorder %v540, 1
        %v652 = vsel %vm651, %v620, %v615
        %v653 = vsel %vm651, %v644, %v616
        %v654 = vmax.f32 %v648, %v649
        %v655 = vmax.f32 %v654, %v650
        %656 = vmax.xlane.f32.xlu0 %v655
        %v657 = vpop.xlane.xlu0 %656
        %vm658 = vcmp.eq.f32.partialorder %v648, %v657
        %vm659 = vcmp.eq.f32.partialorder %v649, %v657
        %vm660 = vcmp.eq.f32.partialorder %v650, %v657
        %v661 = vsel %vm658, %v578, 2147483647
        %v662 = vsel %vm659, %v572, 2147483647
        %v663 = vsel %vm660, %v576, 2147483647
        %vm664 = vcmp.lt.s32.totalorder %v661, %v662
        %v665 = vsel %vm664, %v661, %v662
        %vm666 = vcmp.lt.s32.totalorder %v665, %v663
        %v667 = vsel %vm666, %v665, %v663
        %v668 = vand.u32 %v667, 65535
        %v669 = vshra.s32 %v667, 16
        %v670 = vcvt.s32.f32 %v668
        %v671 = vcvt.s32.f32 %v669
        %672 = vmin.xlane.f32.xlu0 %v671
        %v673 = vpop.xlane.xlu0 %672
        %vm674 = vcmp.eq.f32.partialorder %v671, %v673
        %v675 = vsel %vm674, %v670, inf
        %676 = vmin.xlane.f32.xlu0 %v675
        %v677 = vpop.xlane.xlu0 %676
        %v678 = vcvt.f32.s32 %v677
        %v679 = vcvt.f32.s32 %v673
        %v680 = vshll.u32 %v679, 16
        %v681 = vadd.s32 %v680, %v678
        %vm682 = vcmp.eq.s32.totalorder %v578, %v681
        %vm683 = vcmp.eq.s32.totalorder %v572, %v681
        %vm684 = vcmp.eq.s32.totalorder %v576, %v681
        %v685 = vsel %vm682, -inf, %v648
        %v686 = vsel %vm683, -inf, %v649
        %v687 = vsel %vm684, -inf, %v650
        %vm688 = vcmp.eq.s32.totalorder %v540, 2
        %v689 = vsel %vm688, %v657, %v652
        %v690 = vsel %vm688, %v681, %v653
        %v691 = vmax.f32 %v685, %v686
        %v692 = vmax.f32 %v691, %v687
        %693 = vmax.xlane.f32.xlu0 %v692
        %v694 = vpop.xlane.xlu0 %693
        %vm695 = vcmp.eq.f32.partialorder %v685, %v694
        %vm696 = vcmp.eq.f32.partialorder %v686, %v694
        %vm697 = vcmp.eq.f32.partialorder %v687, %v694
        %v698 = vsel %vm695, %v578, 2147483647
        %v699 = vsel %vm696, %v572, 2147483647
        %v700 = vsel %vm697, %v576, 2147483647
        %vm701 = vcmp.lt.s32.totalorder %v698, %v699
        %v702 = vsel %vm701, %v698, %v699
        %vm703 = vcmp.lt.s32.totalorder %v702, %v700
        %v704 = vsel %vm703, %v702, %v700
        %v705 = vand.u32 %v704, 65535
        %v706 = vshra.s32 %v704, 16
        %v707 = vcvt.s32.f32 %v705
        %v708 = vcvt.s32.f32 %v706
        %709 = vmin.xlane.f32.xlu0 %v708
        %v710 = vpop.xlane.xlu0 %709
        %vm711 = vcmp.eq.f32.partialorder %v708, %v710
        %v712 = vsel %vm711, %v707, inf
        %713 = vmin.xlane.f32.xlu0 %v712
        %v714 = vpop.xlane.xlu0 %713
        %v715 = vcvt.f32.s32 %v714
        %v716 = vcvt.f32.s32 %v710
        %v717 = vshll.u32 %v716, 16
        %v718 = vadd.s32 %v717, %v715
        %vm719 = vcmp.eq.s32.totalorder %v578, %v718
        %vm720 = vcmp.eq.s32.totalorder %v572, %v718
        %vm721 = vcmp.eq.s32.totalorder %v576, %v718
        %v722 = vsel %vm719, -inf, %v685
        %v723 = vsel %vm720, -inf, %v686
        %v724 = vsel %vm721, -inf, %v687
        %vm725 = vcmp.eq.s32.totalorder %v540, 3
        %v726 = vsel %vm725, %v694, %v689
        %v727 = vsel %vm725, %v718, %v690
        %v728 = vmax.f32 %v722, %v723
        %v729 = vmax.f32 %v728, %v724
        %730 = vmax.xlane.f32.xlu0 %v729
        %v731 = vpop.xlane.xlu0 %730
        %vm732 = vcmp.eq.f32.partialorder %v722, %v731
        %vm733 = vcmp.eq.f32.partialorder %v723, %v731
        %vm734 = vcmp.eq.f32.partialorder %v724, %v731
        %v735 = vsel %vm732, %v578, 2147483647
        %v736 = vsel %vm733, %v572, 2147483647
        %v737 = vsel %vm734, %v576, 2147483647
        %vm738 = vcmp.lt.s32.totalorder %v735, %v736
        %v739 = vsel %vm738, %v735, %v736
        %vm740 = vcmp.lt.s32.totalorder %v739, %v737
        %v741 = vsel %vm740, %v739, %v737
        %v742 = vand.u32 %v741, 65535
        %v743 = vshra.s32 %v741, 16
        %v744 = vcvt.s32.f32 %v742
        %v745 = vcvt.s32.f32 %v743
        %746 = vmin.xlane.f32.xlu0 %v745
        %v747 = vpop.xlane.xlu0 %746
        %vm748 = vcmp.eq.f32.partialorder %v745, %v747
        %v749 = vsel %vm748, %v744, inf
        %750 = vmin.xlane.f32.xlu0 %v749
        %v751 = vpop.xlane.xlu0 %750
        %v752 = vcvt.f32.s32 %v751
        %v753 = vcvt.f32.s32 %v747
        %v754 = vshll.u32 %v753, 16
        %v755 = vadd.s32 %v754, %v752
        %vm756 = vcmp.eq.s32.totalorder %v540, 4
        %v757 = vsel %vm756, %v731, %v726
        %v758 = vsel %vm756, %v755, %v727
        %759 = vst [vmem:[#allocation2] sm:$0xff] %v757
        %760 = vst [vmem:[#allocation3] sm:$0xff] %v758
        %p761 = scmp.eq.s32.totalorder %s28, 3
        // Predicated region
        $region49: #{tpu_custom_call.1} parent=31 // pred_check
          %p762 = pneg %p761
        $region50: #{tpu_custom_call.1} parent=31 // pred_check_branch
          %764 = sbr.rel (%p762) target = $region52
        $region51: #{tpu_custom_call.1} parent=31 // pred_region
          %v765 = vmul.f32 %v757, 14.285714
          %766 = vmax.xlane.f32.xlu0 %v765
          %v767 = vpop.xlane.xlu0 %766
          %v768 = vsub.f32 %v765, %v767
          %v769 = vmul.f32 %v768, 1.442695
          %v770 = vpow.pop %v769
          %771 = vadd.xlane.f32.xlu0 %v770
          %v772 = vpop.xlane.xlu0 %771
          %v773 = vrcp.pop %v772
          %v774 = vmul.f32 %v772, %v773
          %v775 = vsub.f32 2.0, %v774
          %v776 = vmul.f32 %v773, %v775
          %v777 = vmul.f32 %v770, %v776
          %v778 = vand.u32 %v758, 15
          %v779 = vsel %vm614, %v777, 0.0
          %780 = vadd.xlane.f32.xlu0 %v779
          %v781 = vpop.xlane.xlu0 %780
          %v782 = vsel %vm614, %v778, 0
          %v783 = vand.u32 %v782, 65535
          %v784 = vshra.s32 %v782, 16
          %v785 = vcvt.s32.f32 %v783
          %v786 = vcvt.s32.f32 %v784
          %787 = vmax.xlane.f32.xlu0 %v786
          %v788 = vpop.xlane.xlu0 %787
          %vm789 = vcmp.eq.f32.partialorder %v786, %v788
          %v790 = vsel %vm789, %v785, -inf
          %791 = vmax.xlane.f32.xlu0 %v790
          %v792 = vpop.xlane.xlu0 %791
          %v793 = vcvt.f32.s32 %v792
          %v794 = vcvt.f32.s32 %v788
          %v795 = vshll.u32 %v794, 16
          %v796 = vadd.s32 %v795, %v793
          %vm797 = vcmp.eq.s32.totalorder %v796, %v540
          %v798 = vadd.f32 %v781, 0.0
          %v799 = vsel %vm797, %v798, 0.0
          %800 = vst [vmem:[%s276] sm:$0xff] %v799
          %v801 = vsel %vm651, %v777, 0.0
          %802 = vadd.xlane.f32.xlu0 %v801
          %v803 = vpop.xlane.xlu0 %802
          %v804 = vsel %vm651, %v778, 0
          %v805 = vand.u32 %v804, 65535
          %v806 = vshra.s32 %v804, 16
          %v807 = vcvt.s32.f32 %v805
          %v808 = vcvt.s32.f32 %v806
          %809 = vmax.xlane.f32.xlu0 %v808
          %v810 = vpop.xlane.xlu0 %809
          %vm811 = vcmp.eq.f32.partialorder %v808, %v810
          %v812 = vsel %vm811, %v807, -inf
          %813 = vmax.xlane.f32.xlu0 %v812
          %v814 = vpop.xlane.xlu0 %813
          %v815 = vcvt.f32.s32 %v814
          %v816 = vcvt.f32.s32 %v810
          %v817 = vshll.u32 %v816, 16
          %v818 = vadd.s32 %v817, %v815
          %vm819 = vcmp.eq.s32.totalorder %v818, %v540
          %v820 = vadd.f32 %v799, %v803
          %v821 = vsel %vm819, %v820, %v799
          %v822 = vsel %vm688, %v777, 0.0
          %823 = vadd.xlane.f32.xlu0 %v822
          %v824 = vpop.xlane.xlu0 %823
          %v825 = vsel %vm688, %v778, 0
          %v826 = vand.u32 %v825, 65535
          %v827 = vshra.s32 %v825, 16
          %v828 = vcvt.s32.f32 %v826
          %v829 = vcvt.s32.f32 %v827
          %830 = vmax.xlane.f32.xlu0 %v829
          %v831 = vpop.xlane.xlu0 %830
          %vm832 = vcmp.eq.f32.partialorder %v829, %v831
          %v833 = vsel %vm832, %v828, -inf
          %834 = vmax.xlane.f32.xlu0 %v833
          %v835 = vpop.xlane.xlu0 %834
          %v836 = vcvt.f32.s32 %v835
          %v837 = vcvt.f32.s32 %v831
          %v838 = vshll.u32 %v837, 16
          %v839 = vadd.s32 %v838, %v836
          %vm840 = vcmp.eq.s32.totalorder %v839, %v540
          %v841 = vadd.f32 %v821, %v824
          %v842 = vsel %vm840, %v841, %v821
          %843 = vst [vmem:[%s276 + $0x8] sm:$0xff] %v842
          %v844 = vsel %vm725, %v777, 0.0
          %845 = vadd.xlane.f32.xlu0 %v844
          %v846 = vpop.xlane.xlu0 %845
          %v847 = vsel %vm725, %v778, 0
          %v848 = vand.u32 %v847, 65535
          %v849 = vshra.s32 %v847, 16
          %v850 = vcvt.s32.f32 %v848
          %v851 = vcvt.s32.f32 %v849
          %852 = vmax.xlane.f32.xlu0 %v851
          %v853 = vpop.xlane.xlu0 %852
          %vm854 = vcmp.eq.f32.partialorder %v851, %v853
          %v855 = vsel %vm854, %v850, -inf
          %856 = vmax.xlane.f32.xlu0 %v855
          %v857 = vpop.xlane.xlu0 %856
          %v858 = vcvt.f32.s32 %v857
          %v859 = vcvt.f32.s32 %v853
          %v860 = vshll.u32 %v859, 16
          %v861 = vadd.s32 %v860, %v858
          %vm862 = vcmp.eq.s32.totalorder %v861, %v540
          %v863 = vadd.f32 %v842, %v846
          %v864 = vsel %vm862, %v863, %v842
          %v865 = vsel %vm756, %v777, 0.0
          %866 = vadd.xlane.f32.xlu0 %v865
          %v867 = vpop.xlane.xlu0 %866
          %v868 = vsel %vm756, %v778, 0
          %v869 = vand.u32 %v868, 65535
          %v870 = vshra.s32 %v868, 16
          %v871 = vcvt.s32.f32 %v869
          %v872 = vcvt.s32.f32 %v870
          %873 = vmax.xlane.f32.xlu0 %v872
          %v874 = vpop.xlane.xlu0 %873
          %vm875 = vcmp.eq.f32.partialorder %v872, %v874
          %v876 = vsel %vm875, %v871, -inf
          %877 = vmax.xlane.f32.xlu0 %v876
          %v878 = vpop.xlane.xlu0 %877
          %v879 = vcvt.f32.s32 %v878
          %v880 = vcvt.f32.s32 %v874
          %v881 = vshll.u32 %v880, 16
          %v882 = vadd.s32 %v881, %v879
          %vm883 = vcmp.eq.s32.totalorder %v882, %v540
          %v884 = vadd.f32 %v864, %v867
          %v885 = vsel %vm883, %v884, %v864
          %886 = vst [vmem:[%s276 + $0x10] sm:$0xff] %v885
        $region52: #{tpu_custom_call.1} parent=31 // pred_fallthru
          _
        %v887 = vld [vmem:[#allocation2 + $0x8] sm:$0xff]
        %v888 = vld [vmem:[#allocation3 + $0x8] sm:$0xff]
        %v889 = vmax.f32 %v887, %v554
        %v890 = vmax.f32 %v889, %v555
        %891 = vmax.xlane.f32.xlu0 %v890
        %v892 = vpop.xlane.xlu0 %891
        %vm893 = vcmp.eq.f32.partialorder %v887, %v892
        %vm894 = vcmp.eq.f32.partialorder %v554, %v892
        %vm895 = vcmp.eq.f32.partialorder %v555, %v892
        %v896 = vsel %vm893, %v888, 2147483647
        %v897 = vsel %vm894, %v572, 2147483647
        %v898 = vsel %vm895, %v576, 2147483647
        %vm899 = vcmp.lt.s32.totalorder %v896, %v897
        %v900 = vsel %vm899, %v896, %v897
        %vm901 = vcmp.lt.s32.totalorder %v900, %v898
        %v902 = vsel %vm901, %v900, %v898
        %v903 = vand.u32 %v902, 65535
        %v904 = vshra.s32 %v902, 16
        %v905 = vcvt.s32.f32 %v903
        %v906 = vcvt.s32.f32 %v904
        %907 = vmin.xlane.f32.xlu0 %v906
        %v908 = vpop.xlane.xlu0 %907
        %vm909 = vcmp.eq.f32.partialorder %v906, %v908
        %v910 = vsel %vm909, %v905, inf
        %911 = vmin.xlane.f32.xlu0 %v910
        %v912 = vpop.xlane.xlu0 %911
        %v913 = vcvt.f32.s32 %v912
        %v914 = vcvt.f32.s32 %v908
        %v915 = vshll.u32 %v914, 16
        %v916 = vadd.s32 %v915, %v913
        %vm917 = vcmp.eq.s32.totalorder %v888, %v916
        %vm918 = vcmp.eq.s32.totalorder %v572, %v916
        %vm919 = vcmp.eq.s32.totalorder %v576, %v916
        %v920 = vsel %vm917, -inf, %v887
        %v921 = vsel %vm918, -inf, %v554
        %v922 = vsel %vm919, -inf, %v555
        %v923 = vsel %vm614, %v892, -inf
        %v924 = vsel %vm614, %v916, %v579
        %v925 = vmax.f32 %v920, %v921
        %v926 = vmax.f32 %v925, %v922
        %927 = vmax.xlane.f32.xlu0 %v926
        %v928 = vpop.xlane.xlu0 %927
        %vm929 = vcmp.eq.f32.partialorder %v920, %v928
        %vm930 = vcmp.eq.f32.partialorder %v921, %v928
        %vm931 = vcmp.eq.f32.partialorder %v922, %v928
        %v932 = vsel %vm929, %v888, 2147483647
        %v933 = vsel %vm930, %v572, 2147483647
        %v934 = vsel %vm931, %v576, 2147483647
        %vm935 = vcmp.lt.s32.totalorder %v932, %v933
        %v936 = vsel %vm935, %v932, %v933
        %vm937 = vcmp.lt.s32.totalorder %v936, %v934
        %v938 = vsel %vm937, %v936, %v934
        %v939 = vand.u32 %v938, 65535
        %v940 = vshra.s32 %v938, 16
        %v941 = vcvt.s32.f32 %v939
        %v942 = vcvt.s32.f32 %v940
        %943 = vmin.xlane.f32.xlu0 %v942
        %v944 = vpop.xlane.xlu0 %943
        %vm945 = vcmp.eq.f32.partialorder %v942, %v944
        %v946 = vsel %vm945, %v941, inf
        %947 = vmin.xlane.f32.xlu0 %v946
        %v948 = vpop.xlane.xlu0 %947
        %v949 = vcvt.f32.s32 %v948
        %v950 = vcvt.f32.s32 %v944
        %v951 = vshll.u32 %v950, 16
        %v952 = vadd.s32 %v951, %v949
        %vm953 = vcmp.eq.s32.totalorder %v888, %v952
        %vm954 = vcmp.eq.s32.totalorder %v572, %v952
        %vm955 = vcmp.eq.s32.totalorder %v576, %v952
        %v956 = vsel %vm953, -inf, %v920
        %v957 = vsel %vm954, -inf, %v921
        %v958 = vsel %vm955, -inf, %v922
        %v959 = vsel %vm651, %v928, %v923
        %v960 = vsel %vm651, %v952, %v924
        %v961 = vmax.f32 %v956, %v957
        %v962 = vmax.f32 %v961, %v958
        %963 = vmax.xlane.f32.xlu0 %v962
        %v964 = vpop.xlane.xlu0 %963
        %vm965 = vcmp.eq.f32.partialorder %v956, %v964
        %vm966 = vcmp.eq.f32.partialorder %v957, %v964
        %vm967 = vcmp.eq.f32.partialorder %v958, %v964
        %v968 = vsel %vm965, %v888, 2147483647
        %v969 = vsel %vm966, %v572, 2147483647
        %v970 = vsel %vm967, %v576, 2147483647
        %vm971 = vcmp.lt.s32.totalorder %v968, %v969
        %v972 = vsel %vm971, %v968, %v969
        %vm973 = vcmp.lt.s32.totalorder %v972, %v970
        %v974 = vsel %vm973, %v972, %v970
        %v975 = vand.u32 %v974, 65535
        %v976 = vshra.s32 %v974, 16
        %v977 = vcvt.s32.f32 %v975
        %v978 = vcvt.s32.f32 %v976
        %979 = vmin.xlane.f32.xlu0 %v978
        %v980 = vpop.xlane.xlu0 %979
        %vm981 = vcmp.eq.f32.partialorder %v978, %v980
        %v982 = vsel %vm981, %v977, inf
        %983 = vmin.xlane.f32.xlu0 %v982
        %v984 = vpop.xlane.xlu0 %983
        %v985 = vcvt.f32.s32 %v984
        %v986 = vcvt.f32.s32 %v980
        %v987 = vshll.u32 %v986, 16
        %v988 = vadd.s32 %v987, %v985
        %vm989 = vcmp.eq.s32.totalorder %v888, %v988
        %vm990 = vcmp.eq.s32.totalorder %v572, %v988
        %vm991 = vcmp.eq.s32.totalorder %v576, %v988
        %v992 = vsel %vm989, -inf, %v956
        %v993 = vsel %vm990, -inf, %v957
        %v994 = vsel %vm991, -inf, %v958
        %v995 = vsel %vm688, %v964, %v959
        %v996 = vsel %vm688, %v988, %v960
        %v997 = vmax.f32 %v992, %v993
        %v998 = vmax.f32 %v997, %v994
        %999 = vmax.xlane.f32.xlu0 %v998
        %v1000 = vpop.xlane.xlu0 %999
        %vm1001 = vcmp.eq.f32.partialorder %v992, %v1000
        %vm1002 = vcmp.eq.f32.partialorder %v993, %v1000
        %vm1003 = vcmp.eq.f32.partialorder %v994, %v1000
        %v1004 = vsel %vm1001, %v888, 2147483647
        %v1005 = vsel %vm1002, %v572, 2147483647
        %v1006 = vsel %vm1003, %v576, 2147483647
        %vm1007 = vcmp.lt.s32.totalorder %v1004, %v1005
        %v1008 = vsel %vm1007, %v1004, %v1005
        %vm1009 = vcmp.lt.s32.totalorder %v1008, %v1006
        %v1010 = vsel %vm1009, %v1008, %v1006
        %v1011 = vand.u32 %v1010, 65535
        %v1012 = vshra.s32 %v1010, 16
        %v1013 = vcvt.s32.f32 %v1011
        %v1014 = vcvt.s32.f32 %v1012
        %1015 = vmin.xlane.f32.xlu0 %v1014
        %v1016 = vpop.xlane.xlu0 %1015
        %vm1017 = vcmp.eq.f32.partialorder %v1014, %v1016
        %v1018 = vsel %vm1017, %v1013, inf
        %1019 = vmin.xlane.f32.xlu0 %v1018
        %v1020 = vpop.xlane.xlu0 %1019
        %v1021 = vcvt.f32.s32 %v1020
        %v1022 = vcvt.f32.s32 %v1016
        %v1023 = vshll.u32 %v1022, 16
        %v1024 = vadd.s32 %v1023, %v1021
        %vm1025 = vcmp.eq.s32.totalorder %v888, %v1024
        %vm1026 = vcmp.eq.s32.totalorder %v572, %v1024
        %vm1027 = vcmp.eq.s32.totalorder %v576, %v1024
        %v1028 = vsel %vm1025, -inf, %v992
        %v1029 = vsel %vm1026, -inf, %v993
        %v1030 = vsel %vm1027, -inf, %v994
        %v1031 = vsel %vm725, %v1000, %v995
        %v1032 = vsel %vm725, %v1024, %v996
        %v1033 = vmax.f32 %v1028, %v1029
        %v1034 = vmax.f32 %v1033, %v1030
        %1035 = vmax.xlane.f32.xlu0 %v1034
        %v1036 = vpop.xlane.xlu0 %1035
        %vm1037 = vcmp.eq.f32.partialorder %v1028, %v1036
        %vm1038 = vcmp.eq.f32.partialorder %v1029, %v1036
        %vm1039 = vcmp.eq.f32.partialorder %v1030, %v1036
        %v1040 = vsel %vm1037, %v888, 2147483647
        %v1041 = vsel %vm1038, %v572, 2147483647
        %v1042 = vsel %vm1039, %v576, 2147483647
        %vm1043 = vcmp.lt.s32.totalorder %v1040, %v1041
        %v1044 = vsel %vm1043, %v1040, %v1041
        %vm1045 = vcmp.lt.s32.totalorder %v1044, %v1042
        %v1046 = vsel %vm1045, %v1044, %v1042
        %v1047 = vand.u32 %v1046, 65535
        %v1048 = vshra.s32 %v1046, 16
        %v1049 = vcvt.s32.f32 %v1047
        %v1050 = vcvt.s32.f32 %v1048
        %1051 = vmin.xlane.f32.xlu0 %v1050
        %v1052 = vpop.xlane.xlu0 %1051
        %vm1053 = vcmp.eq.f32.partialorder %v1050, %v1052
        %v1054 = vsel %vm1053, %v1049, inf
        %1055 = vmin.xlane.f32.xlu0 %v1054
        %v1056 = vpop.xlane.xlu0 %1055
        %v1057 = vcvt.f32.s32 %v1056
        %v1058 = vcvt.f32.s32 %v1052
        %v1059 = vshll.u32 %v1058, 16
        %v1060 = vadd.s32 %v1059, %v1057
        %v1061 = vsel %vm756, %v1036, %v1031
        %v1062 = vsel %vm756, %v1060, %v1032
        %1063 = vst [vmem:[#allocation2 + $0x8] sm:$0xff] %v1061
        %1064 = vst [vmem:[#allocation3 + $0x8] sm:$0xff] %v1062
        // Predicated region
        $region53: #{tpu_custom_call.1} parent=31 // pred_check
          %p1065 = pneg %p761
        $region54: #{tpu_custom_call.1} parent=31 // pred_check_branch
          %1067 = sbr.rel (%p1065) target = $region56
        $region55: #{tpu_custom_call.1} parent=31 // pred_region
          %v1068 = vmul.f32 %v1061, 14.285714
          %1069 = vmax.xlane.f32.xlu0 %v1068
          %v1070 = vpop.xlane.xlu0 %1069
          %v1071 = vsub.f32 %v1068, %v1070
          %v1072 = vmul.f32 %v1071, 1.442695
          %v1073 = vpow.pop %v1072
          %1074 = vadd.xlane.f32.xlu0 %v1073
          %v1075 = vpop.xlane.xlu0 %1074
          %v1076 = vrcp.pop %v1075
          %v1077 = vmul.f32 %v1075, %v1076
          %v1078 = vsub.f32 2.0, %v1077
          %v1079 = vmul.f32 %v1076, %v1078
          %v1080 = vmul.f32 %v1073, %v1079
          %v1081 = vand.u32 %v1062, 15
          %v1082 = vsel %vm614, %v1080, 0.0
          %1083 = vadd.xlane.f32.xlu0 %v1082
          %v1084 = vpop.xlane.xlu0 %1083
          %v1085 = vsel %vm614, %v1081, 0
          %v1086 = vand.u32 %v1085, 65535
          %v1087 = vshra.s32 %v1085, 16
          %v1088 = vcvt.s32.f32 %v1086
          %v1089 = vcvt.s32.f32 %v1087
          %1090 = vmax.xlane.f32.xlu0 %v1089
          %v1091 = vpop.xlane.xlu0 %1090
          %vm1092 = vcmp.eq.f32.partialorder %v1089, %v1091
          %v1093 = vsel %vm1092, %v1088, -inf
          %1094 = vmax.xlane.f32.xlu0 %v1093
          %v1095 = vpop.xlane.xlu0 %1094
          %v1096 = vcvt.f32.s32 %v1095
          %v1097 = vcvt.f32.s32 %v1091
          %v1098 = vshll.u32 %v1097, 16
          %v1099 = vadd.s32 %v1098, %v1096
          %vm1100 = vcmp.eq.s32.totalorder %v1099, %v540
          %v1101 = vadd.f32 %v1084, 0.0
          %v1102 = vsel %vm1100, %v1101, 0.0
          %1103 = vst [vmem:[%s276 + $0x18] sm:$0xff] %v1102
          %v1104 = vsel %vm651, %v1080, 0.0
          %1105 = vadd.xlane.f32.xlu0 %v1104
          %v1106 = vpop.xlane.xlu0 %1105
          %v1107 = vsel %vm651, %v1081, 0
          %v1108 = vand.u32 %v1107, 65535
          %v1109 = vshra.s32 %v1107, 16
          %v1110 = vcvt.s32.f32 %v1108
          %v1111 = vcvt.s32.f32 %v1109
          %1112 = vmax.xlane.f32.xlu0 %v1111
          %v1113 = vpop.xlane.xlu0 %1112
          %vm1114 = vcmp.eq.f32.partialorder %v1111, %v1113
          %v1115 = vsel %vm1114, %v1110, -inf
          %1116 = vmax.xlane.f32.xlu0 %v1115
          %v1117 = vpop.xlane.xlu0 %1116
          %v1118 = vcvt.f32.s32 %v1117
          %v1119 = vcvt.f32.s32 %v1113
          %v1120 = vshll.u32 %v1119, 16
          %v1121 = vadd.s32 %v1120, %v1118
          %vm1122 = vcmp.eq.s32.totalorder %v1121, %v540
          %v1123 = vadd.f32 %v1102, %v1106
          %v1124 = vsel %vm1122, %v1123, %v1102
          %v1125 = vsel %vm688, %v1080, 0.0
          %1126 = vadd.xlane.f32.xlu0 %v1125
          %v1127 = vpop.xlane.xlu0 %1126
          %v1128 = vsel %vm688, %v1081, 0
          %v1129 = vand.u32 %v1128, 65535
          %v1130 = vshra.s32 %v1128, 16
          %v1131 = vcvt.s32.f32 %v1129
          %v1132 = vcvt.s32.f32 %v1130
          %1133 = vmax.xlane.f32.xlu0 %v1132
          %v1134 = vpop.xlane.xlu0 %1133
          %vm1135 = vcmp.eq.f32.partialorder %v1132, %v1134
          %v1136 = vsel %vm1135, %v1131, -inf
          %1137 = vmax.xlane.f32.xlu0 %v1136
          %v1138 = vpop.xlane.xlu0 %1137
          %v1139 = vcvt.f32.s32 %v1138
          %v1140 = vcvt.f32.s32 %v1134
          %v1141 = vshll.u32 %v1140, 16
          %v1142 = vadd.s32 %v1141, %v1139
          %vm1143 = vcmp.eq.s32.totalorder %v1142, %v540
          %v1144 = vadd.f32 %v1124, %v1127
          %v1145 = vsel %vm1143, %v1144, %v1124
          %1146 = vst [vmem:[%s276 + $0x20] sm:$0xff] %v1145
          %v1147 = vsel %vm725, %v1080, 0.0
          %1148 = vadd.xlane.f32.xlu0 %v1147
          %v1149 = vpop.xlane.xlu0 %1148
          %v1150 = vsel %vm725, %v1081, 0
          %v1151 = vand.u32 %v1150, 65535
          %v1152 = vshra.s32 %v1150, 16
          %v1153 = vcvt.s32.f32 %v1151
          %v1154 = vcvt.s32.f32 %v1152
          %1155 = vmax.xlane.f32.xlu0 %v1154
          %v1156 = vpop.xlane.xlu0 %1155
          %vm1157 = vcmp.eq.f32.partialorder %v1154, %v1156
          %v1158 = vsel %vm1157, %v1153, -inf
          %1159 = vmax.xlane.f32.xlu0 %v1158
          %v1160 = vpop.xlane.xlu0 %1159
          %v1161 = vcvt.f32.s32 %v1160
          %v1162 = vcvt.f32.s32 %v1156
          %v1163 = vshll.u32 %v1162, 16
          %v1164 = vadd.s32 %v1163, %v1161
          %vm1165 = vcmp.eq.s32.totalorder %v1164, %v540
          %v1166 = vadd.f32 %v1145, %v1149
          %v1167 = vsel %vm1165, %v1166, %v1145
          %v1168 = vsel %vm756, %v1080, 0.0
          %1169 = vadd.xlane.f32.xlu0 %v1168
          %v1170 = vpop.xlane.xlu0 %1169
          %v1171 = vsel %vm756, %v1081, 0
          %v1172 = vand.u32 %v1171, 65535
          %v1173 = vshra.s32 %v1171, 16
          %v1174 = vcvt.s32.f32 %v1172
          %v1175 = vcvt.s32.f32 %v1173
          %1176 = vmax.xlane.f32.xlu0 %v1175
          %v1177 = vpop.xlane.xlu0 %1176
          %vm1178 = vcmp.eq.f32.partialorder %v1175, %v1177
          %v1179 = vsel %vm1178, %v1174, -inf
          %1180 = vmax.xlane.f32.xlu0 %v1179
          %v1181 = vpop.xlane.xlu0 %1180
          %v1182 = vcvt.f32.s32 %v1181
          %v1183 = vcvt.f32.s32 %v1177
          %v1184 = vshll.u32 %v1183, 16
          %v1185 = vadd.s32 %v1184, %v1182
          %vm1186 = vcmp.eq.s32.totalorder %v1185, %v540
          %v1187 = vadd.f32 %v1167, %v1170
          %v1188 = vsel %vm1186, %v1187, %v1167
          %1189 = vst [vmem:[%s276 + $0x28] sm:$0xff] %v1188
        $region56: #{tpu_custom_call.1} parent=31 // pred_fallthru
          _
        %s1190 = sand.u32 %s121, 1
        %s1191 = scalar_lea.sflag [#allocation6], %s1190
        %s1192 = sand.u32 %s121, 1
        %s1193 = smul.addr %s1192, 48
        %s1194 = scalar_lea.vmem [#allocation10], %s1193
        // Predicated region
        $region57: #{tpu_custom_call.1} parent=31 // pred_check
          %p1195 = pneg %p131
        $region58: #{tpu_custom_call.1} parent=31 // pred_check_branch
          %1197 = sbr.rel (%p1195) target = $region60
        $region59: #{tpu_custom_call.1} parent=31 // pred_region
          %s1198 = smul.u32 2, %s27
          %s1200 = ssub.s32 768, 768
          %1201 = vsyncadd %s1191, %s1200
          %s1202 = smul.addr %s1198, 3
          %s1203 = smul.addr %s1202, 128
          %s1204 = scalar_lea.hbm %s3, %s1203
          %s1205 = sshll.u32 %s1194, 4
          %s1206 = int_to_ptr.vmem [resolvable:$true] %s1205
          %1211 = dma.vmem_to_hbm [thread:$0]  %s1206, 768, %s1204, %s1191, 384, 384, 24
        $region60: #{tpu_custom_call.1} parent=31 // pred_fallthru
          _
      $region32: #{tpu_custom_call.1} parent=5 // pred_fallthru
        _
      %p1212 = scmp.le.s32.totalorder 2, %s18
      // Predicated region
      $region61: #{tpu_custom_call.1} parent=5 // pred_check
        %p1213 = pneg %p1212
      $region62: #{tpu_custom_call.1} parent=5 // pred_check_branch
        %1215 = sbr.rel (%p1213) target = $region64
      $region63: #{tpu_custom_call.1} parent=5 // pred_region
        %s1216 = ssub.s32 %s18, 2
        // Predicated region
        $region65: #{tpu_custom_call.1} parent=63 // pred_check
          %p1217 = pneg %p137
        $region66: #{tpu_custom_call.1} parent=63 // pred_check_branch
          %1219 = sbr.rel (%p1217) target = $region68
        $region67: #{tpu_custom_call.1} parent=63 // pred_region
          %s1220 = sand.u32 %s122, 1
          %s1221 = scalar_lea.sflag [#allocation6], %s1220
          %s1222 = sand.u32 %s122, 1
          %s1223 = smul.addr %s1222, 48
          %s1224 = scalar_lea.vmem [#allocation10], %s1223
          %1225 = dma.done %s1221, 768
        $region68: #{tpu_custom_call.1} parent=63 // pred_fallthru
          _
      $region64: #{tpu_custom_call.1} parent=5 // pred_fallthru
        _
    $region6: #{tpu_custom_call.1} parent=1 // loop_footer
      %s22 = sadd.s32 1, %s18
    $region7: #{tpu_custom_call.1} parent=1 // loop_footer_branch
      %17 = sbr.rel target = $region3
    $region8: #{tpu_custom_call.1} parent=1 // loop_exit
      _
    %1226 = vsyncpa [#allocation5], 1
    %s1227 = scalar_lea.sflag [#allocation5], 1
    %1228 = vsyncpa %s1227, 1
    %1229 = vsyncpa [#allocation8], 1
    %s1230 = scalar_lea.sflag [#allocation8], 1
    %1231 = vsyncpa %s1230, 1
    %1232 = vsyncpa [#allocation6], 1
    %s1233 = scalar_lea.sflag [#allocation6], 1
    %1234 = vsyncpa %s1233, 1

</llo_original>
